<compile_context>
chip_gen: v5e
topology: v5e:2x2
jax: 0.10.0
libtpu: 0.0.40
codegen_flags: <defaults>
</compile_context>

<pallas_src>
import functools

import jax
import jax.numpy as jnp
from jax import lax
from jax.experimental import pallas as pl
from jax.experimental.pallas import tpu as pltpu

EPS = 1e-5


# ----------------------------- kernels ------------------------------------- #

def _emit_conv3_and_stats(v, w_ref, y_ref, stats_ref, col_ref):
    """3-tap conv (stride 1, pad 1) as one MXU matmul + per-channel sum/sumsq.

    v        : (C, L) activation value for this batch element
    w_ref    : (C, 3C) stacked weights, columns ordered [tap0 | tap1 | tap2]
    y_ref    : (C, L) f32 conv output
    stats_ref: (C, 2) f32 -> [:,0]=sum over L, [:,1]=sumsq over L
    col_ref  : (3C, L) VMEM scratch holding the im2col operand (MXU dtype)
    """
    C, L = v.shape
    vc = v.astype(col_ref.dtype)
    zcol = jnp.zeros((C, 1), col_ref.dtype)
    # rows [0:C)   -> x[:, l-1]  (zero at l=0)
    # rows [C:2C)  -> x[:, l]
    # rows [2C:3C) -> x[:, l+1]  (zero at l=L-1)
    col_ref[0:C, :] = jnp.concatenate([zcol, vc[:, : L - 1]], axis=1)
    col_ref[C:2 * C, :] = vc
    col_ref[2 * C:3 * C, :] = jnp.concatenate([vc[:, 1:], zcol], axis=1)

    y = jnp.dot(w_ref[...], col_ref[...], preferred_element_type=jnp.float32)
    y_ref[...] = y
    s = jnp.sum(y, axis=1, keepdims=True)
    sq = jnp.sum(y * y, axis=1, keepdims=True)
    stats_ref[...] = jnp.concatenate([s, sq], axis=1)


def _conv1_kernel(x_ref, w_ref, y_ref, stats_ref, col_ref):
    _emit_conv3_and_stats(x_ref[...], w_ref, y_ref, stats_ref, col_ref)


def _bn_relu_conv2_kernel(y1_ref, sc_ref, sh_ref, w_ref, y_ref, stats_ref, col_ref):
    # Fused BN1 affine (1 mul + 1 add per element) + ReLU, then conv2.
    h = jnp.maximum(y1_ref[...] * sc_ref[...] + sh_ref[...], 0.0)
    _emit_conv3_and_stats(h, w_ref, y_ref, stats_ref, col_ref)


def _bn_residual_kernel(x_ref, y2_ref, sc_ref, sh_ref, out_ref):
    # out = x + BN2(y2) with BN2 folded into a per-channel scale/shift.
    out_ref[...] = (x_ref[...] + (y2_ref[...] * sc_ref[...] + sh_ref[...])
                    ).astype(out_ref.dtype)


# --------------------------- pallas_call wrappers --------------------------- #

def _compiler_params():
    return pltpu.CompilerParams(
        dimension_semantics=("parallel",),           # batch axis -> megacore on v7x
        vmem_limit_bytes=32 * 1024 * 1024,           # safe on v5e/v6e/v7x
    )


def _conv_pass(x, w_stack, scale=None, shift=None, *, mxu_dtype):
    """One gridded conv pass. Returns (conv_out f32 (N,C,L), stats f32 (N,C,2))."""
    N, C, L = x.shape
    act_spec = pl.BlockSpec((None, C, L), lambda n: (n, 0, 0))
    w_spec = pl.BlockSpec((C, 3 * C), lambda n: (0, 0))
    vec_spec = pl.BlockSpec((C, 1), lambda n: (0, 0))
    stats_spec = pl.BlockSpec((None, C, 2), lambda n: (n, 0, 0))

    itemsize = jnp.dtype(mxu_dtype).itemsize
    cost = pl.CostEstimate(
        flops=2 * N * L * 3 * C * C,
        transcendentals=0,
        bytes_accessed=2 * N * C * L * 4 + 3 * C * C * itemsize + N * C * 2 * 4,
    )

    if scale is None:
        kernel = _conv1_kernel
        in_specs = [act_spec, w_spec]
        args = (x, w_stack)
    else:
        kernel = _bn_relu_conv2_kernel
        in_specs = [act_spec, vec_spec, vec_spec, w_spec]
        args = (x, scale, shift, w_stack)

    return pl.pallas_call(
        kernel,
        grid=(N,),
        in_specs=in_specs,
        out_specs=(act_spec, stats_spec),
        out_shape=(jax.ShapeDtypeStruct((N, C, L), jnp.float32),
                   jax.ShapeDtypeStruct((N, C, 2), jnp.float32)),
        scratch_shapes=[pltpu.VMEM((3 * C, L), mxu_dtype)],
        compiler_params=_compiler_params(),
        cost_estimate=cost,
    )(*args)


def _bn_residual_pass(x, y2, scale, shift):
    N, C, L = x.shape
    act_spec = pl.BlockSpec((None, C, L), lambda n: (n, 0, 0))
    vec_spec = pl.BlockSpec((C, 1), lambda n: (0, 0))
    cost = pl.CostEstimate(flops=3 * N * C * L, transcendentals=0,
                           bytes_accessed=3 * N * C * L * 4)
    return pl.pallas_call(
        _bn_residual_kernel,
        grid=(N,),
        in_specs=[act_spec, act_spec, vec_spec, vec_spec],
        out_specs=act_spec,
        out_shape=jax.ShapeDtypeStruct((N, C, L), x.dtype),
        compiler_params=_compiler_params(),
        cost_estimate=cost,
    )(x, y2, scale, shift)


# ------------------------------- host-side glue ----------------------------- #

def _bn_scale_shift(stats, gamma, beta, count):
    """Fold one-pass batch stats into per-channel scale/shift: BN(y) == y*scale+shift."""
    s = jnp.sum(stats[:, :, 0], axis=0)
    sq = jnp.sum(stats[:, :, 1], axis=0)
    mean = s / count
    var = jnp.maximum(sq / count - mean * mean, 0.0)          # biased variance
    scale = gamma.astype(jnp.float32) * lax.rsqrt(var + EPS)
    shift = beta.astype(jnp.float32) - mean * scale
    C = scale.shape[0]
    return scale.reshape(C, 1), shift.reshape(C, 1)


def _stack_conv_weight(w, mxu_dtype):
    """PyTorch (Cout, Cin, 3) -> (Cout, 3*Cin) tap-major stacked matmul weight."""
    C = w.shape[0]
    return jnp.transpose(w, (0, 2, 1)).reshape(C, 3 * C).astype(mxu_dtype)


@functools.partial(jax.jit, static_argnames=("mxu_dtype",))
def residual_block(x_ncl, w1, g1, b1, w2, g2, b2, mxu_dtype=jnp.float32):
    """x_ncl: (N, C, L) f32 (PyTorch Conv1d layout). w*: (C, C, 3). g*/b*: (C,)."""
    N, C, L = x_ncl.shape
    x = x_ncl.astype(jnp.float32)
    w1s = _stack_conv_weight(w1, mxu_dtype)
    w2s = _stack_conv_weight(w2, mxu_dtype)

    # Pass 1: conv1 + per-sample per-channel (sum, sumsq).
    y1, st1 = _conv_pass(x, w1s, mxu_dtype=mxu_dtype)
    sc1, sh1 = _bn_scale_shift(st1, g1, b1, N * L)
    # Pass 2: fused BN1 affine + ReLU + conv2 + stats.
    y2, st2 = _conv_pass(y1, w2s, sc1, sh1, mxu_dtype=mxu_dtype)
    sc2, sh2 = _bn_scale_shift(st2, g2, b2, N * L)
    # Pass 3: fused BN2 affine + residual add.
    return _bn_residual_pass(x, y2, sc2, sh2)


# ------------------------------- reference ---------------------------------- #

def _reference(x_ncl, w1, g1, b1, w2, g2, b2):
    """Pure-JAX reference matching PyTorch training-mode semantics."""
    def conv1d(x, w):
        return lax.conv_general_dilated(
            x, w, window_strides=(1,), padding=[(1, 1)],
            dimension_numbers=('NCH', 'OIH', 'NCH'),
            precision=lax.Precision.HIGHEST)

    def bn(y, g, b):
        mean = y.mean(axis=(0, 2), keepdims=True)
        var = ((y - mean) ** 2).mean(axis=(0, 2), keepdims=True)
        return (y - mean) / jnp.sqrt(var + EPS) * g[None, :, None] + b[None, :, None]

    h = jax.nn.relu(bn(conv1d(x_ncl, w1), g1, b1))
    return x_ncl + bn(conv1d(h, w2), g2, b2)


if __name__ == "__main__":
    key = jax.random.PRNGKey(0)
    # Small but representative WaveGAN shapes: batch=4, conv_dim=64, seq len=256
    # (L multiple of 128 -> lane-dense stores; C multiple of 8 -> aligned sublanes).
    N, C, L = 4, 64, 256

    k_x, k_w1, k_w2 = jax.random.split(key, 3)
    x = jax.random.normal(k_x, (N, C, L), dtype=jnp.float32)
    # PyTorch Conv1d weight layout: (out_channels, in_channels, kernel_size)
    w1 = jax.random.normal(k_w1, (C, C, 3), dtype=jnp.float32) * 0.1
    w2 = jax.random.normal(k_w2, (C, C, 3), dtype=jnp.float32) * 0.1
    # BatchNorm1d default init: gamma=1, beta=0
    g1 = jnp.ones((C,), jnp.float32); b1 = jnp.zeros((C,), jnp.float32)
    g2 = jnp.ones((C,), jnp.float32); b2 = jnp.zeros((C,), jnp.float32)

    ref = jax.block_until_ready(_reference(x, w1, g1, b1, w2, g2, b2))

    # f32 MXU operands: tight correctness check.
    out = jax.block_until_ready(residual_block(x, w1, g1, b1, w2, g2, b2))
    assert out.shape == (N, C, L)
    assert jnp.allclose(out, ref, atol=5e-4, rtol=5e-4), "f32 kernel mismatch vs reference"

    # bf16 MXU operands (v6e/v7x recommendation), f32 accumulation: looser check.
    out_bf16 = jax.block_until_ready(
        residual_block(x, w1, g1, b1, w2, g2, b2, mxu_dtype=jnp.bfloat16))
    assert out_bf16.shape == (N, C, L)
    assert jnp.allclose(out_bf16, ref, atol=1e-1, rtol=1e-1), "bf16 kernel mismatch vs reference"

    print("KERNEL_OK")
</pallas_src>

<mosaic_0001>
module attributes {stable_mosaic.version = 11 : i64} {
  func.func @_conv1_kernel(%arg0: i32, %arg1: memref<1x64x256xf32, #tpu.memory_space<vmem>>, %arg2: memref<64x192xf32, #tpu.memory_space<vmem>>, %arg3: memref<1x64x256xf32, #tpu.memory_space<vmem>>, %arg4: memref<1x64x2xf32, #tpu.memory_space<vmem>>, %arg5: memref<192x256xf32, #tpu.memory_space<vmem>>) attributes {dimension_semantics = [#tpu.dimension_semantics<parallel>], iteration_bounds = array<i64: 4>, scalar_prefetch = 0 : i64, scratch_operands = 1 : i64, tpu.core_type = #tpu.core_type<tc>, window_params = [{transform_indices = @transform_0, window_bounds = array<i64: 1, 64, 256>}, {pipeline_mode = #tpu.pipeline_mode<synchronous>, transform_indices = @transform_1, window_bounds = array<i64: 64, 192>}, {transform_indices = @transform_2, window_bounds = array<i64: 1, 64, 256>}, {transform_indices = @transform_3, window_bounds = array<i64: 1, 64, 2>}]} {
    %c0 = arith.constant 0 : index
    %c0_0 = arith.constant 0 : index
    %c0_1 = arith.constant 0 : index
    %0 = vector.load %arg1[%c0, %c0_0, %c0_1] : memref<1x64x256xf32, #tpu.memory_space<vmem>>, vector<1x64x256xf32>
    %1 = vector.shape_cast %0 : vector<1x64x256xf32> to vector<64x256xf32>
    %cst = arith.constant 0.000000e+00 : f32
    %2 = vector.broadcast %cst : f32 to vector<64x1xf32>
    %3 = vector.extract_strided_slice %1 {offsets = [0, 0], sizes = [64, 255], strides = [1, 1]} : vector<64x256xf32> to vector<64x255xf32>
    %4 = tpu.concatenate %2, %3 in 1 : vector<64x1xf32>, vector<64x255xf32> -> vector<64x256xf32>
    %c0_2 = arith.constant 0 : index
    %c0_3 = arith.constant 0 : index
    %5 = vector.load %arg5[%c0_2, %c0_3] : memref<192x256xf32, #tpu.memory_space<vmem>>, vector<64x256xf32>
    tpu.vector_store %arg5[%c0_2, %c0_3], %4 {strides = array<i32>} : memref<192x256xf32, #tpu.memory_space<vmem>>, vector<64x256xf32>,
    %c64 = arith.constant 64 : index
    %c0_4 = arith.constant 0 : index
    %6 = vector.load %arg5[%c64, %c0_4] : memref<192x256xf32, #tpu.memory_space<vmem>>, vector<64x256xf32>
    tpu.vector_store %arg5[%c64, %c0_4], %1 {strides = array<i32>} : memref<192x256xf32, #tpu.memory_space<vmem>>, vector<64x256xf32>,
    %7 = vector.extract_strided_slice %1 {offsets = [0, 1], sizes = [64, 255], strides = [1, 1]} : vector<64x256xf32> to vector<64x255xf32>
    %8 = tpu.concatenate %7, %2 in 1 : vector<64x255xf32>, vector<64x1xf32> -> vector<64x256xf32>
    %c128 = arith.constant 128 : index
    %c0_5 = arith.constant 0 : index
    %9 = vector.load %arg5[%c128, %c0_5] : memref<192x256xf32, #tpu.memory_space<vmem>>, vector<64x256xf32>
    tpu.vector_store %arg5[%c128, %c0_5], %8 {strides = array<i32>} : memref<192x256xf32, #tpu.memory_space<vmem>>, vector<64x256xf32>,
    %c0_6 = arith.constant 0 : index
    %c0_7 = arith.constant 0 : index
    %10 = vector.load %arg2[%c0_6, %c0_7] : memref<64x192xf32, #tpu.memory_space<vmem>>, vector<64x192xf32>
    %c0_8 = arith.constant 0 : index
    %c0_9 = arith.constant 0 : index
    %11 = vector.load %arg5[%c0_8, %c0_9] : memref<192x256xf32, #tpu.memory_space<vmem>>, vector<192x256xf32>
    %cst_10 = arith.constant dense<0.000000e+00> : vector<64x256xf32>
    %12 = tpu.matmul %10, %11, %cst_10 {dimension_numbers = #tpu.dot_dimension_numbers<[1], [0], [0], [1], [0, 0, 1, 1], [], []>} : vector<64x192xf32>, vector<192x256xf32>, vector<64x256xf32> -> vector<64x256xf32>
    %c0_11 = arith.constant 0 : index
    %c0_12 = arith.constant 0 : index
    %c0_13 = arith.constant 0 : index
    %13 = vector.load %arg3[%c0_11, %c0_12, %c0_13] : memref<1x64x256xf32, #tpu.memory_space<vmem>>, vector<1x64x256xf32>
    %14 = vector.shape_cast %13 : vector<1x64x256xf32> to vector<64x256xf32>
    %15 = vector.shape_cast %12 : vector<64x256xf32> to vector<1x64x256xf32>
    tpu.vector_store %arg3[%c0_11, %c0_12, %c0_13], %15 {strides = array<i32>} : memref<1x64x256xf32, #tpu.memory_space<vmem>>, vector<1x64x256xf32>,
    %cst_14 = arith.constant dense<0.000000e+00> : vector<64xf32>
    %16 = vector.multi_reduction <add>, %12, %cst_14 [1] : vector<64x256xf32> to vector<64xf32>
    %17 = vector.shape_cast %16 : vector<64xf32> to vector<64x1xf32>
    %18 = arith.mulf %12, %12 : vector<64x256xf32>
    %cst_15 = arith.constant dense<0.000000e+00> : vector<64xf32>
    %19 = vector.multi_reduction <add>, %18, %cst_15 [1] : vector<64x256xf32> to vector<64xf32>
    %20 = vector.shape_cast %19 : vector<64xf32> to vector<64x1xf32>
    %21 = tpu.concatenate %17, %20 in 1 : vector<64x1xf32>, vector<64x1xf32> -> vector<64x2xf32>
    %c0_16 = arith.constant 0 : index
    %c0_17 = arith.constant 0 : index
    %c0_18 = arith.constant 0 : index
    %22 = vector.load %arg4[%c0_16, %c0_17, %c0_18] : memref<1x64x2xf32, #tpu.memory_space<vmem>>, vector<1x64x2xf32>
    %23 = vector.shape_cast %22 : vector<1x64x2xf32> to vector<64x2xf32>
    %24 = vector.shape_cast %21 : vector<64x2xf32> to vector<1x64x2xf32>
    tpu.vector_store %arg4[%c0_16, %c0_17, %c0_18], %24 {strides = array<i32>} : memref<1x64x2xf32, #tpu.memory_space<vmem>>, vector<1x64x2xf32>,
    return
  }
  func.func @transform_0(%arg0: i32) -> (i32, i32, i32) {
    %c0_i32 = arith.constant 0 : i32
    %c0_i32_0 = arith.constant 0 : i32
    %c0_i32_1 = arith.constant 0 : i32
    return %arg0, %c0_i32, %c0_i32_0 : i32, i32, i32
  }
  func.func @transform_1(%arg0: i32) -> (i32, i32) {
    %c0_i32 = arith.constant 0 : i32
    %c0_i32_0 = arith.constant 0 : i32
    %c0_i32_1 = arith.constant 0 : i32
    return %c0_i32, %c0_i32_0 : i32, i32
  }
  func.func @transform_2(%arg0: i32) -> (i32, i32, i32) {
    %c0_i32 = arith.constant 0 : i32
    %c0_i32_0 = arith.constant 0 : i32
    %c0_i32_1 = arith.constant 0 : i32
    return %arg0, %c0_i32, %c0_i32_0 : i32, i32, i32
  }
  func.func @transform_3(%arg0: i32) -> (i32, i32, i32) {
    %c0_i32 = arith.constant 0 : i32
    %c0_i32_0 = arith.constant 0 : i32
    %c0_i32_1 = arith.constant 0 : i32
    return %arg0, %c0_i32, %c0_i32_0 : i32, i32, i32
  }
}

module attributes {stable_mosaic.version = 11 : i64} {
  func.func @_bn_relu_conv2_kernel(%arg0: i32, %arg1: memref<1x64x256xf32, #tpu.memory_space<vmem>>, %arg2: memref<64x1xf32, #tpu.memory_space<vmem>>, %arg3: memref<64x1xf32, #tpu.memory_space<vmem>>, %arg4: memref<64x192xf32, #tpu.memory_space<vmem>>, %arg5: memref<1x64x256xf32, #tpu.memory_space<vmem>>, %arg6: memref<1x64x2xf32, #tpu.memory_space<vmem>>, %arg7: memref<192x256xf32, #tpu.memory_space<vmem>>) attributes {dimension_semantics = [#tpu.dimension_semantics<parallel>], iteration_bounds = array<i64: 4>, scalar_prefetch = 0 : i64, scratch_operands = 1 : i64, tpu.core_type = #tpu.core_type<tc>, window_params = [{transform_indices = @transform_0, window_bounds = array<i64: 1, 64, 256>}, {pipeline_mode = #tpu.pipeline_mode<synchronous>, transform_indices = @transform_1, window_bounds = array<i64: 64, 1>}, {pipeline_mode = #tpu.pipeline_mode<synchronous>, transform_indices = @transform_2, window_bounds = array<i64: 64, 1>}, {pipeline_mode = #tpu.pipeline_mode<synchronous>, transform_indices = @transform_3, window_bounds = array<i64: 64, 192>}, {transform_indices = @transform_4, window_bounds = array<i64: 1, 64, 256>}, {transform_indices = @transform_5, window_bounds = array<i64: 1, 64, 2>}]} {
    %c0 = arith.constant 0 : index
    %c0_0 = arith.constant 0 : index
    %c0_1 = arith.constant 0 : index
    %0 = vector.load %arg1[%c0, %c0_0, %c0_1] : memref<1x64x256xf32, #tpu.memory_space<vmem>>, vector<1x64x256xf32>
    %1 = vector.shape_cast %0 : vector<1x64x256xf32> to vector<64x256xf32>
    %c0_2 = arith.constant 0 : index
    %c0_3 = arith.constant 0 : index
    %2 = vector.load %arg2[%c0_2, %c0_3] : memref<64x1xf32, #tpu.memory_space<vmem>>, vector<64x1xf32>
    %3 = vector.broadcast %2 : vector<64x1xf32> to vector<64x256xf32>
    %4 = arith.mulf %1, %3 : vector<64x256xf32>
    %c0_4 = arith.constant 0 : index
    %c0_5 = arith.constant 0 : index
    %5 = vector.load %arg3[%c0_4, %c0_5] : memref<64x1xf32, #tpu.memory_space<vmem>>, vector<64x1xf32>
    %6 = vector.broadcast %5 : vector<64x1xf32> to vector<64x256xf32>
    %7 = arith.addf %4, %6 : vector<64x256xf32>
    %cst = arith.constant 0.000000e+00 : f32
    %8 = vector.broadcast %cst : f32 to vector<64x256xf32>
    %9 = arith.maximumf %7, %8 : vector<64x256xf32>
    %cst_6 = arith.constant 0.000000e+00 : f32
    %10 = vector.broadcast %cst_6 : f32 to vector<64x1xf32>
    %11 = vector.extract_strided_slice %9 {offsets = [0, 0], sizes = [64, 255], strides = [1, 1]} : vector<64x256xf32> to vector<64x255xf32>
    %12 = tpu.concatenate %10, %11 in 1 : vector<64x1xf32>, vector<64x255xf32> -> vector<64x256xf32>
    %c0_7 = arith.constant 0 : index
    %c0_8 = arith.constant 0 : index
    %13 = vector.load %arg7[%c0_7, %c0_8] : memref<192x256xf32, #tpu.memory_space<vmem>>, vector<64x256xf32>
    tpu.vector_store %arg7[%c0_7, %c0_8], %12 {strides = array<i32>} : memref<192x256xf32, #tpu.memory_space<vmem>>, vector<64x256xf32>,
    %c64 = arith.constant 64 : index
    %c0_9 = arith.constant 0 : index
    %14 = vector.load %arg7[%c64, %c0_9] : memref<192x256xf32, #tpu.memory_space<vmem>>, vector<64x256xf32>
    tpu.vector_store %arg7[%c64, %c0_9], %9 {strides = array<i32>} : memref<192x256xf32, #tpu.memory_space<vmem>>, vector<64x256xf32>,
    %15 = vector.extract_strided_slice %9 {offsets = [0, 1], sizes = [64, 255], strides = [1, 1]} : vector<64x256xf32> to vector<64x255xf32>
    %16 = tpu.concatenate %15, %10 in 1 : vector<64x255xf32>, vector<64x1xf32> -> vector<64x256xf32>
    %c128 = arith.constant 128 : index
    %c0_10 = arith.constant 0 : index
    %17 = vector.load %arg7[%c128, %c0_10] : memref<192x256xf32, #tpu.memory_space<vmem>>, vector<64x256xf32>
    tpu.vector_store %arg7[%c128, %c0_10], %16 {strides = array<i32>} : memref<192x256xf32, #tpu.memory_space<vmem>>, vector<64x256xf32>,
    %c0_11 = arith.constant 0 : index
    %c0_12 = arith.constant 0 : index
    %18 = vector.load %arg4[%c0_11, %c0_12] : memref<64x192xf32, #tpu.memory_space<vmem>>, vector<64x192xf32>
    %c0_13 = arith.constant 0 : index
    %c0_14 = arith.constant 0 : index
    %19 = vector.load %arg7[%c0_13, %c0_14] : memref<192x256xf32, #tpu.memory_space<vmem>>, vector<192x256xf32>
    %cst_15 = arith.constant dense<0.000000e+00> : vector<64x256xf32>
    %20 = tpu.matmul %18, %19, %cst_15 {dimension_numbers = #tpu.dot_dimension_numbers<[1], [0], [0], [1], [0, 0, 1, 1], [], []>} : vector<64x192xf32>, vector<192x256xf32>, vector<64x256xf32> -> vector<64x256xf32>
    %c0_16 = arith.constant 0 : index
    %c0_17 = arith.constant 0 : index
    %c0_18 = arith.constant 0 : index
    %21 = vector.load %arg5[%c0_16, %c0_17, %c0_18] : memref<1x64x256xf32, #tpu.memory_space<vmem>>, vector<1x64x256xf32>
    %22 = vector.shape_cast %21 : vector<1x64x256xf32> to vector<64x256xf32>
    %23 = vector.shape_cast %20 : vector<64x256xf32> to vector<1x64x256xf32>
    tpu.vector_store %arg5[%c0_16, %c0_17, %c0_18], %23 {strides = array<i32>} : memref<1x64x256xf32, #tpu.memory_space<vmem>>, vector<1x64x256xf32>,
    %cst_19 = arith.constant dense<0.000000e+00> : vector<64xf32>
    %24 = vector.multi_reduction <add>, %20, %cst_19 [1] : vector<64x256xf32> to vector<64xf32>
    %25 = vector.shape_cast %24 : vector<64xf32> to vector<64x1xf32>
    %26 = arith.mulf %20, %20 : vector<64x256xf32>
    %cst_20 = arith.constant dense<0.000000e+00> : vector<64xf32>
    %27 = vector.multi_reduction <add>, %26, %cst_20 [1] : vector<64x256xf32> to vector<64xf32>
    %28 = vector.shape_cast %27 : vector<64xf32> to vector<64x1xf32>
    %29 = tpu.concatenate %25, %28 in 1 : vector<64x1xf32>, vector<64x1xf32> -> vector<64x2xf32>
    %c0_21 = arith.constant 0 : index
    %c0_22 = arith.constant 0 : index
    %c0_23 = arith.constant 0 : index
    %30 = vector.load %arg6[%c0_21, %c0_22, %c0_23] : memref<1x64x2xf32, #tpu.memory_space<vmem>>, vector<1x64x2xf32>
    %31 = vector.shape_cast %30 : vector<1x64x2xf32> to vector<64x2xf32>
    %32 = vector.shape_cast %29 : vector<64x2xf32> to vector<1x64x2xf32>
    tpu.vector_store %arg6[%c0_21, %c0_22, %c0_23], %32 {strides = array<i32>} : memref<1x64x2xf32, #tpu.memory_space<vmem>>, vector<1x64x2xf32>,
    return
  }
  func.func @transform_0(%arg0: i32) -> (i32, i32, i32) {
    %c0_i32 = arith.constant 0 : i32
    %c0_i32_0 = arith.constant 0 : i32
    %c0_i32_1 = arith.constant 0 : i32
    return %arg0, %c0_i32, %c0_i32_0 : i32, i32, i32
  }
  func.func @transform_1(%arg0: i32) -> (i32, i32) {
    %c0_i32 = arith.constant 0 : i32
    %c0_i32_0 = arith.constant 0 : i32
    %c0_i32_1 = arith.constant 0 : i32
    return %c0_i32, %c0_i32_0 : i32, i32
  }
  func.func @transform_2(%arg0: i32) -> (i32, i32) {
    %c0_i32 = arith.constant 0 : i32
    %c0_i32_0 = arith.constant 0 : i32
    %c0_i32_1 = arith.constant 0 : i32
    return %c0_i32, %c0_i32_0 : i32, i32
  }
  func.func @transform_3(%arg0: i32) -> (i32, i32) {
    %c0_i32 = arith.constant 0 : i32
    %c0_i32_0 = arith.constant 0 : i32
    %c0_i32_1 = arith.constant 0 : i32
    return %c0_i32, %c0_i32_0 : i32, i32
  }
  func.func @transform_4(%arg0: i32) -> (i32, i32, i32) {
    %c0_i32 = arith.constant 0 : i32
    %c0_i32_0 = arith.constant 0 : i32
    %c0_i32_1 = arith.constant 0 : i32
    return %arg0, %c0_i32, %c0_i32_0 : i32, i32, i32
  }
  func.func @transform_5(%arg0: i32) -> (i32, i32, i32) {
    %c0_i32 = arith.constant 0 : i32
    %c0_i32_0 = arith.constant 0 : i32
    %c0_i32_1 = arith.constant 0 : i32
    return %arg0, %c0_i32, %c0_i32_0 : i32, i32, i32
  }
}

module attributes {stable_mosaic.version = 11 : i64} {
  func.func @_bn_residual_kernel(%arg0: i32, %arg1: memref<1x64x256xf32, #tpu.memory_space<vmem>>, %arg2: memref<1x64x256xf32, #tpu.memory_space<vmem>>, %arg3: memref<64x1xf32, #tpu.memory_space<vmem>>, %arg4: memref<64x1xf32, #tpu.memory_space<vmem>>, %arg5: memref<1x64x256xf32, #tpu.memory_space<vmem>>) attributes {dimension_semantics = [#tpu.dimension_semantics<parallel>], iteration_bounds = array<i64: 4>, scalar_prefetch = 0 : i64, scratch_operands = 0 : i64, tpu.core_type = #tpu.core_type<tc>, window_params = [{transform_indices = @transform_0, window_bounds = array<i64: 1, 64, 256>}, {transform_indices = @transform_1, window_bounds = array<i64: 1, 64, 256>}, {pipeline_mode = #tpu.pipeline_mode<synchronous>, transform_indices = @transform_2, window_bounds = array<i64: 64, 1>}, {pipeline_mode = #tpu.pipeline_mode<synchronous>, transform_indices = @transform_3, window_bounds = array<i64: 64, 1>}, {transform_indices = @transform_4, window_bounds = array<i64: 1, 64, 256>}]} {
    %c0 = arith.constant 0 : index
    %c0_0 = arith.constant 0 : index
    %c0_1 = arith.constant 0 : index
    %0 = vector.load %arg1[%c0, %c0_0, %c0_1] : memref<1x64x256xf32, #tpu.memory_space<vmem>>, vector<1x64x256xf32>
    %1 = vector.shape_cast %0 : vector<1x64x256xf32> to vector<64x256xf32>
    %c0_2 = arith.constant 0 : index
    %c0_3 = arith.constant 0 : index
    %c0_4 = arith.constant 0 : index
    %2 = vector.load %arg2[%c0_2, %c0_3, %c0_4] : memref<1x64x256xf32, #tpu.memory_space<vmem>>, vector<1x64x256xf32>
    %3 = vector.shape_cast %2 : vector<1x64x256xf32> to vector<64x256xf32>
    %c0_5 = arith.constant 0 : index
    %c0_6 = arith.constant 0 : index
    %4 = vector.load %arg3[%c0_5, %c0_6] : memref<64x1xf32, #tpu.memory_space<vmem>>, vector<64x1xf32>
    %5 = vector.broadcast %4 : vector<64x1xf32> to vector<64x256xf32>
    %6 = arith.mulf %3, %5 : vector<64x256xf32>
    %c0_7 = arith.constant 0 : index
    %c0_8 = arith.constant 0 : index
    %7 = vector.load %arg4[%c0_7, %c0_8] : memref<64x1xf32, #tpu.memory_space<vmem>>, vector<64x1xf32>
    %8 = vector.broadcast %7 : vector<64x1xf32> to vector<64x256xf32>
    %9 = arith.addf %6, %8 : vector<64x256xf32>
    %10 = arith.addf %1, %9 : vector<64x256xf32>
    %c0_9 = arith.constant 0 : index
    %c0_10 = arith.constant 0 : index
    %c0_11 = arith.constant 0 : index
    %11 = vector.load %arg5[%c0_9, %c0_10, %c0_11] : memref<1x64x256xf32, #tpu.memory_space<vmem>>, vector<1x64x256xf32>
    %12 = vector.shape_cast %11 : vector<1x64x256xf32> to vector<64x256xf32>
    %13 = vector.shape_cast %10 : vector<64x256xf32> to vector<1x64x256xf32>
    tpu.vector_store %arg5[%c0_9, %c0_10, %c0_11], %13 {strides = array<i32>} : memref<1x64x256xf32, #tpu.memory_space<vmem>>, vector<1x64x256xf32>,
    return
  }
  func.func @transform_0(%arg0: i32) -> (i32, i32, i32) {
    %c0_i32 = arith.constant 0 : i32
    %c0_i32_0 = arith.constant 0 : i32
    %c0_i32_1 = arith.constant 0 : i32
    return %arg0, %c0_i32, %c0_i32_0 : i32, i32, i32
  }
  func.func @transform_1(%arg0: i32) -> (i32, i32, i32) {
    %c0_i32 = arith.constant 0 : i32
    %c0_i32_0 = arith.constant 0 : i32
    %c0_i32_1 = arith.constant 0 : i32
    return %arg0, %c0_i32, %c0_i32_0 : i32, i32, i32
  }
  func.func @transform_2(%arg0: i32) -> (i32, i32) {
    %c0_i32 = arith.constant 0 : i32
    %c0_i32_0 = arith.constant 0 : i32
    %c0_i32_1 = arith.constant 0 : i32
    return %c0_i32, %c0_i32_0 : i32, i32
  }
  func.func @transform_3(%arg0: i32) -> (i32, i32) {
    %c0_i32 = arith.constant 0 : i32
    %c0_i32_0 = arith.constant 0 : i32
    %c0_i32_1 = arith.constant 0 : i32
    return %c0_i32, %c0_i32_0 : i32, i32
  }
  func.func @transform_4(%arg0: i32) -> (i32, i32, i32) {
    %c0_i32 = arith.constant 0 : i32
    %c0_i32_0 = arith.constant 0 : i32
    %c0_i32_1 = arith.constant 0 : i32
    return %arg0, %c0_i32, %c0_i32_0 : i32, i32, i32
  }
}

</mosaic_0001>

<llo_original>
// kernel: residual_block.5
$region0: #{residual_block.5}
  #allocation0 [shape = 'u32[]', space=smem, size = 0x4, offset = 0x4, fixed_abs, tag = 'smem constant byte address 0x4 - core index']
  #allocation1 [shape = 'u32[72,128]{1,0:T(1,128)}', space=vmem, size = 0x9000, scoped, tag = 'internal scratch']
  %s0 = inlined_call_operand.vmem [shape: f32[4,64,256], index: 0, kind: input, shape index: {}]
  %s1 = inlined_call_operand.vmem [shape: f32[4,64,256], index: 1, kind: input, shape index: {}]
  %s2 = inlined_call_operand.vmem [shape: f32[64,1], index: 2, kind: input, shape index: {}]
  %s3 = inlined_call_operand.vmem [shape: f32[64,1], index: 3, kind: input, shape index: {}]
  %s4 = inlined_call_operand.hbm [shape: f32[4,64,256], index: 4, kind: output, shape index: {}]
  %s5 = sld [smem:[#allocation0]]
  $region49: #{residual_block.5} parent=0
    _
  %s7 = ssub.s32 1, %s5
  %s8 = scalar_select 0, %s7, %s5
  $region1: #{residual_block.5} parent=0
    #allocation2 [shape = 'u8[131072]{0}', space=vmem, size = 0x20000, scoped, tag = 'output window, operand 0']
    #allocation3 [shape = 's32[2]{0}', space=sflag, size = 0x8, scoped, tag = 'scoped memory for residual_block.5']
    %9 = vsyncpa [#allocation3], 0
    %s10 = scalar_lea.sflag [#allocation3], 1
    %11 = vsyncpa %s10, 0
    loop: start=0, step=1, limit=6
    $region2: #{residual_block.5} parent=1 // loop_pre_header
      _
    $region3: #{residual_block.5} parent=1 // loop_header
      %s13 = sphi 0, %s17
      %p14 = scmp.ge.s32.totalorder %s13, 6
      %s23 = sphi 0, %s25
      %s26 = sphi 0, %s23
      %s27 = sphi 0, %s26
      %s43 = sphi 0, %s27
      %s49 = sphi 0, %s51
      %s52 = sphi 0, %s49
      %s53 = sphi 0, %s52
      %s69 = sphi 0, %s53
      %s73 = sphi 0, %s73
      %s75 = sphi 0, %s73
      %s76 = sphi 0, %s75
      %s90 = sphi 0, %s76
      %s94 = sphi 0, %s94
      %s96 = sphi 0, %s94
      %s97 = sphi 0, %s96
      %s111 = sphi 0, %s97
      %s117 = sphi 0, %s119
      %s120 = sphi 0, %s117
      %s121 = sphi 0, %s120
      %s137 = sphi 0, %s121
    $region4: #{residual_block.5} parent=1 // loop_header_branch
      %16 = sbr.rel (%p14) target = $region8
    $region5: #{residual_block.5} parent=1 // loop_body
      %s18 = ssub.s32 %s13, 1
      %s19 = ssub.s32 %s13, 2
      %s20 = sadd.s32 %s13, 1
      %s21 = ssub.s32 %s13, %s20
      %p22 = scmp.eq.s32.totalorder %s21, 0
      %s24 = sadd.s32 %s23, 1
      %s25 = scalar_select %p22, %s23, %s24
      %p28 = pneg %p22
      %p29 = scmp.eq.s32.totalorder %s13, 3
      %p30 = por %p28, %p29
      %p31 = scmp.ne.s32.totalorder %s23, %s26
      %p32 = scmp.eq.s32.totalorder %s13, 0
      %p33 = por %p31, %p32
      %p34 = scmp.ne.s32.totalorder %s23, %s26
      %p35 = scmp.eq.s32.totalorder %s18, 3
      %p36 = por %p34, %p35
      %p37 = scmp.ne.s32.totalorder %s26, %s27
      %p38 = scmp.eq.s32.totalorder %s18, 0
      %p39 = por %p37, %p38
      %p40 = scmp.ne.s32.totalorder %s26, %s27
      %p41 = scmp.eq.s32.totalorder %s19, 3
      %p42 = por %p40, %p41
      %p44 = scmp.ne.s32.totalorder %s27, %s43
      %p45 = scmp.eq.s32.totalorder %s19, 0
      %p46 = por %p44, %p45
      %s47 = ssub.s32 %s13, %s20
      %p48 = scmp.eq.s32.totalorder %s47, 0
      %s50 = sadd.s32 %s49, 1
      %s51 = scalar_select %p48, %s49, %s50
      %p54 = pneg %p48
      %p55 = scmp.eq.s32.totalorder %s13, 3
      %p56 = por %p54, %p55
      %p57 = scmp.ne.s32.totalorder %s49, %s52
      %p58 = scmp.eq.s32.totalorder %s13, 0
      %p59 = por %p57, %p58
      %p60 = scmp.ne.s32.totalorder %s49, %s52
      %p61 = scmp.eq.s32.totalorder %s18, 3
      %p62 = por %p60, %p61
      %p63 = scmp.ne.s32.totalorder %s52, %s53
      %p64 = scmp.eq.s32.totalorder %s18, 0
      %p65 = por %p63, %p64
      %p66 = scmp.ne.s32.totalorder %s52, %s53
      %p67 = scmp.eq.s32.totalorder %s19, 3
      %p68 = por %p66, %p67
      %p70 = scmp.ne.s32.totalorder %s53, %s69
      %p71 = scmp.eq.s32.totalorder %s19, 0
      %p72 = por %p70, %p71
      %s74 = sadd.s32 %s73, 1
      %p77 = scmp.eq.s32.totalorder %s13, 3
      %p78 = scmp.ne.s32.totalorder %s73, %s75
      %p79 = scmp.eq.s32.totalorder %s13, 0
      %p80 = por %p78, %p79
      %p81 = scmp.ne.s32.totalorder %s73, %s75
      %p82 = scmp.eq.s32.totalorder %s18, 3
      %p83 = por %p81, %p82
      %p84 = scmp.ne.s32.totalorder %s75, %s76
      %p85 = scmp.eq.s32.totalorder %s18, 0
      %p86 = por %p84, %p85
      %p87 = scmp.ne.s32.totalorder %s75, %s76
      %p88 = scmp.eq.s32.totalorder %s19, 3
      %p89 = por %p87, %p88
      %p91 = scmp.ne.s32.totalorder %s76, %s90
      %p92 = scmp.eq.s32.totalorder %s19, 0
      %p93 = por %p91, %p92
      %s95 = sadd.s32 %s94, 1
      %p98 = scmp.eq.s32.totalorder %s13, 3
      %p99 = scmp.ne.s32.totalorder %s94, %s96
      %p100 = scmp.eq.s32.totalorder %s13, 0
      %p101 = por %p99, %p100
      %p102 = scmp.ne.s32.totalorder %s94, %s96
      %p103 = scmp.eq.s32.totalorder %s18, 3
      %p104 = por %p102, %p103
      %p105 = scmp.ne.s32.totalorder %s96, %s97
      %p106 = scmp.eq.s32.totalorder %s18, 0
      %p107 = por %p105, %p106
      %p108 = scmp.ne.s32.totalorder %s96, %s97
      %p109 = scmp.eq.s32.totalorder %s19, 3
      %p110 = por %p108, %p109
      %p112 = scmp.ne.s32.totalorder %s97, %s111
      %p113 = scmp.eq.s32.totalorder %s19, 0
      %p114 = por %p112, %p113
      %s115 = ssub.s32 %s13, %s20
      %p116 = scmp.eq.s32.totalorder %s115, 0
      %s118 = sadd.s32 %s117, 1
      %s119 = scalar_select %p116, %s117, %s118
      %p122 = pneg %p116
      %p123 = scmp.eq.s32.totalorder %s13, 3
      %p124 = por %p122, %p123
      %p125 = scmp.ne.s32.totalorder %s117, %s120
      %p126 = scmp.eq.s32.totalorder %s13, 0
      %p127 = por %p125, %p126
      %p128 = scmp.ne.s32.totalorder %s117, %s120
      %p129 = scmp.eq.s32.totalorder %s18, 3
      %p130 = por %p128, %p129
      %p131 = scmp.ne.s32.totalorder %s120, %s121
      %p132 = scmp.eq.s32.totalorder %s18, 0
      %p133 = por %p131, %p132
      %p134 = scmp.ne.s32.totalorder %s120, %s121
      %p135 = scmp.eq.s32.totalorder %s19, 3
      %p136 = por %p134, %p135
      %p138 = scmp.ne.s32.totalorder %s121, %s137
      %p139 = scmp.eq.s32.totalorder %s19, 0
      %p140 = por %p138, %p139
      %p141 = scmp.le.s32.totalorder 1, %s13
      %p142 = scmp.lt.s32.totalorder %s13, 5
      %p143 = pnand %p141, %p142
      %p144 = pneg %p143
      // Predicated region
      $region9: #{residual_block.5} parent=5 // pred_check
        _
      $region10: #{residual_block.5} parent=5 // pred_check_branch
        %146 = sbr.rel (%p143) target = $region12
      $region11: #{residual_block.5} parent=5 // pred_region
        %s147 = ssub.s32 %s13, 1
        // Predicated region
        $region13: #{residual_block.5} parent=11 // pred_check
          %p148 = pneg %p86
        $region14: #{residual_block.5} parent=11 // pred_check_branch
          %150 = sbr.rel (%p148) target = $region16
        $region15: #{residual_block.5} parent=11 // pred_region
          _
        $region16: #{residual_block.5} parent=11 // pred_fallthru
          _
        // Predicated region
        $region17: #{residual_block.5} parent=11 // pred_check
          %p151 = pneg %p107
        $region18: #{residual_block.5} parent=11 // pred_check_branch
          %153 = sbr.rel (%p151) target = $region20
        $region19: #{residual_block.5} parent=11 // pred_region
          _
        $region20: #{residual_block.5} parent=11 // pred_fallthru
          _
      $region12: #{residual_block.5} parent=5 // pred_fallthru
        _
      %p154 = scmp.lt.s32.totalorder %s13, 4
      // Predicated region
      $region21: #{residual_block.5} parent=5 // pred_check
        %p155 = pneg %p154
      $region22: #{residual_block.5} parent=5 // pred_check_branch
        %157 = sbr.rel (%p155) target = $region24
      $region23: #{residual_block.5} parent=5 // pred_region
        // Predicated region
        $region25: #{residual_block.5} parent=23 // pred_check
          %p158 = pneg %p33
        $region26: #{residual_block.5} parent=23 // pred_check_branch
          %160 = sbr.rel (%p158) target = $region28
        $region27: #{residual_block.5} parent=23 // pred_region
          %p161 = scmp.lt.s32.totalorder %s13, 3
          %s162 = scalar_select %p161, %s13, 3
          %s163 = smul.addr %s162, 16
          %s164 = smul.addr %s163, 8
          %s165 = scalar_lea.vmem %s0, %s164
        $region28: #{residual_block.5} parent=23 // pred_fallthru
          _
        // Predicated region
        $region29: #{residual_block.5} parent=23 // pred_check
          %p166 = pneg %p59
        $region30: #{residual_block.5} parent=23 // pred_check_branch
          %168 = sbr.rel (%p166) target = $region32
        $region31: #{residual_block.5} parent=23 // pred_region
          %p169 = scmp.lt.s32.totalorder %s13, 3
          %s170 = scalar_select %p169, %s13, 3
          %s171 = smul.addr %s170, 16
          %s172 = smul.addr %s171, 8
          %s173 = scalar_lea.vmem %s1, %s172
        $region32: #{residual_block.5} parent=23 // pred_fallthru
          _
      $region24: #{residual_block.5} parent=5 // pred_fallthru
        _
      %p174 = scmp.le.s32.totalorder 1, %s13
      %p175 = scmp.lt.s32.totalorder %s13, 5
      %p176 = pnand %p174, %p175
      %p177 = pneg %p176
      // Predicated region
      $region33: #{residual_block.5} parent=5 // pred_check
        _
      $region34: #{residual_block.5} parent=5 // pred_check_branch
        %179 = sbr.rel (%p176) target = $region36
      $region35: #{residual_block.5} parent=5 // pred_region
        %s180 = ssub.s32 %s13, 1
        %p181 = scmp.lt.s32.totalorder %s18, 3
        %s182 = scalar_select %p181, %s18, 3
        %s183 = smul.addr %s182, 16
        %s184 = smul.addr %s183, 8
        %s185 = scalar_lea.vmem %s0, %s184
        %p186 = pneg %p39
        %p187 = pneg %p36
        %p188 = scmp.lt.s32.totalorder %s18, 3
        %s189 = scalar_select %p188, %s18, 3
        %s190 = smul.addr %s189, 16
        %s191 = smul.addr %s190, 8
        %s192 = scalar_lea.vmem %s1, %s191
        %p193 = pneg %p65
        %p194 = pneg %p62
        %p195 = pneg %p86
        %p196 = pneg %p83
        %p197 = pneg %p107
        %p198 = pneg %p104
        %p199 = pneg %p133
        %p200 = pneg %p130
        %s201 = sand.u32 %s120, 1
        %s202 = scalar_lea.sflag [#allocation3], %s201
        %s203 = sand.u32 %s120, 1
        %s204 = smul.addr %s203, 128
        %s205 = scalar_lea.vmem [#allocation2], %s204
        %p206 = scmp.lt.s32.totalorder %s18, 3
        %s207 = scalar_select %p206, %s18, 3
        %s208 = smul.addr %s207, 16
        %s209 = smul.addr %s208, 8
        %s210 = scalar_lea.vmem %s0, %s209
        %p211 = scmp.lt.s32.totalorder %s18, 3
        %s212 = scalar_select %p211, %s18, 3
        %s213 = smul.addr %s212, 16
        %s214 = smul.addr %s213, 8
        %s215 = scalar_lea.vmem %s1, %s214
        %v216 = vld [vmem:[%s210] sm:$0xff]
        %v217 = vld [vmem:[%s210 + $0x8] sm:$0xff]
        %v218 = vld [vmem:[%s210 + $0x10] sm:$0xff]
        %v219 = vld [vmem:[%s210 + $0x18] sm:$0xff]
        %v220 = vld [vmem:[%s210 + $0x20] sm:$0xff]
        %v221 = vld [vmem:[%s210 + $0x28] sm:$0xff]
        %v222 = vld [vmem:[%s210 + $0x30] sm:$0xff]
        %v223 = vld [vmem:[%s210 + $0x38] sm:$0xff]
        %v224 = vld [vmem:[%s210 + $0x40] sm:$0xff]
        %v225 = vld [vmem:[%s210 + $0x48] sm:$0xff]
        %v226 = vld [vmem:[%s210 + $0x50] sm:$0xff]
        %v227 = vld [vmem:[%s210 + $0x58] sm:$0xff]
        %v228 = vld [vmem:[%s210 + $0x60] sm:$0xff]
        %v229 = vld [vmem:[%s210 + $0x68] sm:$0xff]
        %v230 = vld [vmem:[%s210 + $0x70] sm:$0xff]
        %v231 = vld [vmem:[%s210 + $0x78] sm:$0xff]
        %v232 = vld [vmem:[%s215] sm:$0xff]
        %v233 = vld [vmem:[%s215 + $0x8] sm:$0xff]
        %v234 = vld [vmem:[%s215 + $0x10] sm:$0xff]
        %v235 = vld [vmem:[%s215 + $0x18] sm:$0xff]
        %v236 = vld [vmem:[%s215 + $0x20] sm:$0xff]
        %v237 = vld [vmem:[%s215 + $0x28] sm:$0xff]
        %v238 = vld [vmem:[%s215 + $0x30] sm:$0xff]
        %v239 = vld [vmem:[%s215 + $0x38] sm:$0xff]
        %v240 = vld [vmem:[%s215 + $0x40] sm:$0xff]
        %v241 = vld [vmem:[%s215 + $0x48] sm:$0xff]
        %v242 = vld [vmem:[%s215 + $0x50] sm:$0xff]
        %v243 = vld [vmem:[%s215 + $0x58] sm:$0xff]
        %v244 = vld [vmem:[%s215 + $0x60] sm:$0xff]
        %v245 = vld [vmem:[%s215 + $0x68] sm:$0xff]
        %v246 = vld [vmem:[%s215 + $0x70] sm:$0xff]
        %v247 = vld [vmem:[%s215 + $0x78] sm:$0xff]
        %v248 = vld [vmem:[%s2] sm:$0xff]
        %v249 = vld [vmem:[%s2 + $0x8] sm:$0xff]
        %v250 = vld [vmem:[%s2 + $0x10] sm:$0xff]
        %v251 = vld [vmem:[%s2 + $0x18] sm:$0xff]
        %v252 = vld [vmem:[%s2 + $0x20] sm:$0xff]
        %v253 = vld [vmem:[%s2 + $0x28] sm:$0xff]
        %v254 = vld [vmem:[%s2 + $0x30] sm:$0xff]
        %v255 = vld [vmem:[%s2 + $0x38] sm:$0xff]
        %257 = vset.pattern.permute.xlu0 0
        %258 = vperm.xlu0 %257, %v248
        %v259 = vpop.permute.xlu0 %258
        %262 = vset.pattern.permute.xlu0 0
        %263 = vperm.xlu0 %262, %v249
        %v264 = vpop.permute.xlu0 %263
        %267 = vset.pattern.permute.xlu0 0
        %268 = vperm.xlu0 %267, %v250
        %v269 = vpop.permute.xlu0 %268
        %272 = vset.pattern.permute.xlu0 0
        %273 = vperm.xlu0 %272, %v251
        %v274 = vpop.permute.xlu0 %273
        %277 = vset.pattern.permute.xlu0 0
        %278 = vperm.xlu0 %277, %v252
        %v279 = vpop.permute.xlu0 %278
        %282 = vset.pattern.permute.xlu0 0
        %283 = vperm.xlu0 %282, %v253
        %v284 = vpop.permute.xlu0 %283
        %287 = vset.pattern.permute.xlu0 0
        %288 = vperm.xlu0 %287, %v254
        %v289 = vpop.permute.xlu0 %288
        %292 = vset.pattern.permute.xlu0 0
        %293 = vperm.xlu0 %292, %v255
        %v294 = vpop.permute.xlu0 %293
        %v296 = vmul.f32 %v232, %v259
        %v297 = vmul.f32 %v233, %v259
        %v298 = vmul.f32 %v234, %v264
        %v299 = vmul.f32 %v235, %v264
        %v300 = vmul.f32 %v236, %v269
        %v301 = vmul.f32 %v237, %v269
        %v302 = vmul.f32 %v238, %v274
        %v303 = vmul.f32 %v239, %v274
        %v304 = vmul.f32 %v240, %v279
        %v305 = vmul.f32 %v241, %v279
        %v306 = vmul.f32 %v242, %v284
        %v307 = vmul.f32 %v243, %v284
        %v308 = vmul.f32 %v244, %v289
        %v309 = vmul.f32 %v245, %v289
        %v310 = vmul.f32 %v246, %v294
        %v311 = vmul.f32 %v247, %v294
        %v312 = vld [vmem:[%s3] sm:$0xff]
        %v313 = vld [vmem:[%s3 + $0x8] sm:$0xff]
        %v314 = vld [vmem:[%s3 + $0x10] sm:$0xff]
        %v315 = vld [vmem:[%s3 + $0x18] sm:$0xff]
        %v316 = vld [vmem:[%s3 + $0x20] sm:$0xff]
        %v317 = vld [vmem:[%s3 + $0x28] sm:$0xff]
        %v318 = vld [vmem:[%s3 + $0x30] sm:$0xff]
        %v319 = vld [vmem:[%s3 + $0x38] sm:$0xff]
        %321 = vset.pattern.permute.xlu0 0
        %322 = vperm.xlu0 %321, %v312
        %v323 = vpop.permute.xlu0 %322
        %326 = vset.pattern.permute.xlu0 0
        %327 = vperm.xlu0 %326, %v313
        %v328 = vpop.permute.xlu0 %327
        %331 = vset.pattern.permute.xlu0 0
        %332 = vperm.xlu0 %331, %v314
        %v333 = vpop.permute.xlu0 %332
        %336 = vset.pattern.permute.xlu0 0
        %337 = vperm.xlu0 %336, %v315
        %v338 = vpop.permute.xlu0 %337
        %341 = vset.pattern.permute.xlu0 0
        %342 = vperm.xlu0 %341, %v316
        %v343 = vpop.permute.xlu0 %342
        %346 = vset.pattern.permute.xlu0 0
        %347 = vperm.xlu0 %346, %v317
        %v348 = vpop.permute.xlu0 %347
        %351 = vset.pattern.permute.xlu0 0
        %352 = vperm.xlu0 %351, %v318
        %v353 = vpop.permute.xlu0 %352
        %356 = vset.pattern.permute.xlu0 0
        %357 = vperm.xlu0 %356, %v319
        %v358 = vpop.permute.xlu0 %357
        %v360 = vadd.f32 %v296, %v323
        %v361 = vadd.f32 %v297, %v323
        %v362 = vadd.f32 %v298, %v328
        %v363 = vadd.f32 %v299, %v328
        %v364 = vadd.f32 %v300, %v333
        %v365 = vadd.f32 %v301, %v333
        %v366 = vadd.f32 %v302, %v338
        %v367 = vadd.f32 %v303, %v338
        %v368 = vadd.f32 %v304, %v343
        %v369 = vadd.f32 %v305, %v343
        %v370 = vadd.f32 %v306, %v348
        %v371 = vadd.f32 %v307, %v348
        %v372 = vadd.f32 %v308, %v353
        %v373 = vadd.f32 %v309, %v353
        %v374 = vadd.f32 %v310, %v358
        %v375 = vadd.f32 %v311, %v358
        %v376 = vadd.f32 %v216, %v360
        %v377 = vadd.f32 %v217, %v361
        %v378 = vadd.f32 %v218, %v362
        %v379 = vadd.f32 %v219, %v363
        %v380 = vadd.f32 %v220, %v364
        %v381 = vadd.f32 %v221, %v365
        %v382 = vadd.f32 %v222, %v366
        %v383 = vadd.f32 %v223, %v367
        %v384 = vadd.f32 %v224, %v368
        %v385 = vadd.f32 %v225, %v369
        %v386 = vadd.f32 %v226, %v370
        %v387 = vadd.f32 %v227, %v371
        %v388 = vadd.f32 %v228, %v372
        %v389 = vadd.f32 %v229, %v373
        %v390 = vadd.f32 %v230, %v374
        %v391 = vadd.f32 %v231, %v375
        %392 = vst [vmem:[%s205] sm:$0xff] %v376
        %393 = vst [vmem:[%s205 + $0x8] sm:$0xff] %v377
        %394 = vst [vmem:[%s205 + $0x10] sm:$0xff] %v378
        %395 = vst [vmem:[%s205 + $0x18] sm:$0xff] %v379
        %396 = vst [vmem:[%s205 + $0x20] sm:$0xff] %v380
        %397 = vst [vmem:[%s205 + $0x28] sm:$0xff] %v381
        %398 = vst [vmem:[%s205 + $0x30] sm:$0xff] %v382
        %399 = vst [vmem:[%s205 + $0x38] sm:$0xff] %v383
        %400 = vst [vmem:[%s205 + $0x40] sm:$0xff] %v384
        %401 = vst [vmem:[%s205 + $0x48] sm:$0xff] %v385
        %402 = vst [vmem:[%s205 + $0x50] sm:$0xff] %v386
        %403 = vst [vmem:[%s205 + $0x58] sm:$0xff] %v387
        %404 = vst [vmem:[%s205 + $0x60] sm:$0xff] %v388
        %405 = vst [vmem:[%s205 + $0x68] sm:$0xff] %v389
        %406 = vst [vmem:[%s205 + $0x70] sm:$0xff] %v390
        %407 = vst [vmem:[%s205 + $0x78] sm:$0xff] %v391
        %s408 = sand.u32 %s120, 1
        %s409 = scalar_lea.sflag [#allocation3], %s408
        %s410 = sand.u32 %s120, 1
        %s411 = smul.addr %s410, 128
        %s412 = scalar_lea.vmem [#allocation2], %s411
        // Predicated region
        $region37: #{residual_block.5} parent=35 // pred_check
          %p413 = pneg %p130
        $region38: #{residual_block.5} parent=35 // pred_check_branch
          %415 = sbr.rel (%p413) target = $region40
        $region39: #{residual_block.5} parent=35 // pred_region
          %417 = vsyncadd %s409, 0
          %s418 = smul.addr %s18, 16
          %s419 = smul.addr %s418, 8
          %s420 = scalar_lea.hbm %s4, %s419
          %s421 = sshll.u32 %s412, 4
          %s422 = int_to_ptr.vmem [resolvable:$true] %s421
          %s423 = sshll.u32 %s420, 4
          %s424 = int_to_ptr.hbm [resolvable:$true] %s423
          %429 = dma.vmem_to_hbm [thread:$0]  %s422, 2048, %s424, %s409, 256, 256, 16
        $region40: #{residual_block.5} parent=35 // pred_fallthru
          _
      $region36: #{residual_block.5} parent=5 // pred_fallthru
        _
      %p430 = scmp.le.s32.totalorder 2, %s13
      // Predicated region
      $region41: #{residual_block.5} parent=5 // pred_check
        %p431 = pneg %p430
      $region42: #{residual_block.5} parent=5 // pred_check_branch
        %433 = sbr.rel (%p431) target = $region44
      $region43: #{residual_block.5} parent=5 // pred_region
        %s434 = ssub.s32 %s13, 2
        // Predicated region
        $region45: #{residual_block.5} parent=43 // pred_check
          %p435 = pneg %p136
        $region46: #{residual_block.5} parent=43 // pred_check_branch
          %437 = sbr.rel (%p435) target = $region48
        $region47: #{residual_block.5} parent=43 // pred_region
          %s438 = sand.u32 %s121, 1
          %s439 = scalar_lea.sflag [#allocation3], %s438
          %s440 = sand.u32 %s121, 1
          %s441 = smul.addr %s440, 128
          %s442 = scalar_lea.vmem [#allocation2], %s441
          %444 = dma.done %s439, 2048
        $region48: #{residual_block.5} parent=43 // pred_fallthru
          _
      $region44: #{residual_block.5} parent=5 // pred_fallthru
        _
    $region6: #{residual_block.5} parent=1 // loop_footer
      %s17 = sadd.s32 1, %s13
    $region7: #{residual_block.5} parent=1 // loop_footer_branch
      %12 = sbr.rel target = $region3
    $region8: #{residual_block.5} parent=1 // loop_exit
      _
    %445 = vsyncpa [#allocation3], 1
    %s446 = scalar_lea.sflag [#allocation3], 1
    %447 = vsyncpa %s446, 1

// kernel: residual_block.3
$region0: #{residual_block.3}
  #allocation0 [shape = 'u32[]', space=smem, size = 0x4, offset = 0x4, fixed_abs, tag = 'smem constant byte address 0x4 - core index']
  #allocation1 [shape = 'u32[72,128]{1,0:T(1,128)}', space=vmem, size = 0x9000, scoped, tag = 'internal scratch']
  #allocation2 [shape = 'f32[192,256]{1,0:T(8,128)}', space=vmem, size = 0x30000, scoped, tag = 'scratch operand']
  %s0 = inlined_call_operand.vmem [shape: f32[4,64,256], index: 0, kind: input, shape index: {}]
  %s1 = inlined_call_operand.vmem [shape: f32[64,192], index: 1, kind: input, shape index: {}]
  %s2 = inlined_call_operand.vmem [shape: f32[4,64,256], index: 2, kind: output, shape index: {0}]
  %s3 = inlined_call_operand.vmem [shape: f32[4,64,2], index: 3, kind: output, shape index: {1}]
  %4 = xla_tuple %s2, %s3
  %s5 = sld [smem:[#allocation0]]
  $region49: #{residual_block.3} parent=0
    _
  %s7 = ssub.s32 1, %s5
  %s8 = scalar_select 0, %s7, %s5
  loop: start=0, step=1, limit=6
  $region2: #{residual_block.3} parent=0 // loop_pre_header
    _
  $region3: #{residual_block.3} parent=0 // loop_header
    %s10 = sphi 0, %s14
    %p11 = scmp.ge.s32.totalorder %s10, 6
    %s20 = sphi 0, %s22
    %s23 = sphi 0, %s20
    %s24 = sphi 0, %s23
    %s40 = sphi 0, %s24
    %s44 = sphi 0, %s44
    %s46 = sphi 0, %s44
    %s47 = sphi 0, %s46
    %s61 = sphi 0, %s47
    %s67 = sphi 0, %s69
    %s70 = sphi 0, %s67
    %s71 = sphi 0, %s70
    %s87 = sphi 0, %s71
    %s93 = sphi 0, %s95
    %s96 = sphi 0, %s93
    %s97 = sphi 0, %s96
    %s113 = sphi 0, %s97
  $region4: #{residual_block.3} parent=0 // loop_header_branch
    %13 = sbr.rel (%p11) target = $region8
  $region5: #{residual_block.3} parent=0 // loop_body
    %s15 = ssub.s32 %s10, 1
    %s16 = ssub.s32 %s10, 2
    %s17 = sadd.s32 %s10, 1
    %s18 = ssub.s32 %s10, %s17
    %p19 = scmp.eq.s32.totalorder %s18, 0
    %s21 = sadd.s32 %s20, 1
    %s22 = scalar_select %p19, %s20, %s21
    %p25 = pneg %p19
    %p26 = scmp.eq.s32.totalorder %s10, 3
    %p27 = por %p25, %p26
    %p28 = scmp.ne.s32.totalorder %s20, %s23
    %p29 = scmp.eq.s32.totalorder %s10, 0
    %p30 = por %p28, %p29
    %p31 = scmp.ne.s32.totalorder %s20, %s23
    %p32 = scmp.eq.s32.totalorder %s15, 3
    %p33 = por %p31, %p32
    %p34 = scmp.ne.s32.totalorder %s23, %s24
    %p35 = scmp.eq.s32.totalorder %s15, 0
    %p36 = por %p34, %p35
    %p37 = scmp.ne.s32.totalorder %s23, %s24
    %p38 = scmp.eq.s32.totalorder %s16, 3
    %p39 = por %p37, %p38
    %p41 = scmp.ne.s32.totalorder %s24, %s40
    %p42 = scmp.eq.s32.totalorder %s16, 0
    %p43 = por %p41, %p42
    %s45 = sadd.s32 %s44, 1
    %p48 = scmp.eq.s32.totalorder %s10, 3
    %p49 = scmp.ne.s32.totalorder %s44, %s46
    %p50 = scmp.eq.s32.totalorder %s10, 0
    %p51 = por %p49, %p50
    %p52 = scmp.ne.s32.totalorder %s44, %s46
    %p53 = scmp.eq.s32.totalorder %s15, 3
    %p54 = por %p52, %p53
    %p55 = scmp.ne.s32.totalorder %s46, %s47
    %p56 = scmp.eq.s32.totalorder %s15, 0
    %p57 = por %p55, %p56
    %p58 = scmp.ne.s32.totalorder %s46, %s47
    %p59 = scmp.eq.s32.totalorder %s16, 3
    %p60 = por %p58, %p59
    %p62 = scmp.ne.s32.totalorder %s47, %s61
    %p63 = scmp.eq.s32.totalorder %s16, 0
    %p64 = por %p62, %p63
    %s65 = ssub.s32 %s10, %s17
    %p66 = scmp.eq.s32.totalorder %s65, 0
    %s68 = sadd.s32 %s67, 1
    %s69 = scalar_select %p66, %s67, %s68
    %p72 = pneg %p66
    %p73 = scmp.eq.s32.totalorder %s10, 3
    %p74 = por %p72, %p73
    %p75 = scmp.ne.s32.totalorder %s67, %s70
    %p76 = scmp.eq.s32.totalorder %s10, 0
    %p77 = por %p75, %p76
    %p78 = scmp.ne.s32.totalorder %s67, %s70
    %p79 = scmp.eq.s32.totalorder %s15, 3
    %p80 = por %p78, %p79
    %p81 = scmp.ne.s32.totalorder %s70, %s71
    %p82 = scmp.eq.s32.totalorder %s15, 0
    %p83 = por %p81, %p82
    %p84 = scmp.ne.s32.totalorder %s70, %s71
    %p85 = scmp.eq.s32.totalorder %s16, 3
    %p86 = por %p84, %p85
    %p88 = scmp.ne.s32.totalorder %s71, %s87
    %p89 = scmp.eq.s32.totalorder %s16, 0
    %p90 = por %p88, %p89
    %s91 = ssub.s32 %s10, %s17
    %p92 = scmp.eq.s32.totalorder %s91, 0
    %s94 = sadd.s32 %s93, 1
    %s95 = scalar_select %p92, %s93, %s94
    %p98 = pneg %p92
    %p99 = scmp.eq.s32.totalorder %s10, 3
    %p100 = por %p98, %p99
    %p101 = scmp.ne.s32.totalorder %s93, %s96
    %p102 = scmp.eq.s32.totalorder %s10, 0
    %p103 = por %p101, %p102
    %p104 = scmp.ne.s32.totalorder %s93, %s96
    %p105 = scmp.eq.s32.totalorder %s15, 3
    %p106 = por %p104, %p105
    %p107 = scmp.ne.s32.totalorder %s96, %s97
    %p108 = scmp.eq.s32.totalorder %s15, 0
    %p109 = por %p107, %p108
    %p110 = scmp.ne.s32.totalorder %s96, %s97
    %p111 = scmp.eq.s32.totalorder %s16, 3
    %p112 = por %p110, %p111
    %p114 = scmp.ne.s32.totalorder %s97, %s113
    %p115 = scmp.eq.s32.totalorder %s16, 0
    %p116 = por %p114, %p115
    %p117 = scmp.le.s32.totalorder 1, %s10
    %p118 = scmp.lt.s32.totalorder %s10, 5
    %p119 = pnand %p117, %p118
    %p120 = pneg %p119
    // Predicated region
    $region9: #{residual_block.3} parent=5 // pred_check
      _
    $region10: #{residual_block.3} parent=5 // pred_check_branch
      %122 = sbr.rel (%p119) target = $region12
    $region11: #{residual_block.3} parent=5 // pred_region
      %s123 = ssub.s32 %s10, 1
      // Predicated region
      $region13: #{residual_block.3} parent=11 // pred_check
        %p124 = pneg %p57
      $region14: #{residual_block.3} parent=11 // pred_check_branch
        %126 = sbr.rel (%p124) target = $region16
      $region15: #{residual_block.3} parent=11 // pred_region
        _
      $region16: #{residual_block.3} parent=11 // pred_fallthru
        _
    $region12: #{residual_block.3} parent=5 // pred_fallthru
      _
    %p127 = scmp.lt.s32.totalorder %s10, 4
    // Predicated region
    $region17: #{residual_block.3} parent=5 // pred_check
      %p128 = pneg %p127
    $region18: #{residual_block.3} parent=5 // pred_check_branch
      %130 = sbr.rel (%p128) target = $region20
    $region19: #{residual_block.3} parent=5 // pred_region
      // Predicated region
      $region21: #{residual_block.3} parent=19 // pred_check
        %p131 = pneg %p30
      $region22: #{residual_block.3} parent=19 // pred_check_branch
        %133 = sbr.rel (%p131) target = $region24
      $region23: #{residual_block.3} parent=19 // pred_region
        %p134 = scmp.lt.s32.totalorder %s10, 3
        %s135 = scalar_select %p134, %s10, 3
        %s136 = smul.addr %s135, 16
        %s137 = smul.addr %s136, 8
        %s138 = scalar_lea.vmem %s0, %s137
      $region24: #{residual_block.3} parent=19 // pred_fallthru
        _
    $region20: #{residual_block.3} parent=5 // pred_fallthru
      _
    %p139 = scmp.le.s32.totalorder 1, %s10
    %p140 = scmp.lt.s32.totalorder %s10, 5
    %p141 = pnand %p139, %p140
    %p142 = pneg %p141
    // Predicated region
    $region25: #{residual_block.3} parent=5 // pred_check
      _
    $region26: #{residual_block.3} parent=5 // pred_check_branch
      %144 = sbr.rel (%p141) target = $region28
    $region27: #{residual_block.3} parent=5 // pred_region
      %s145 = ssub.s32 %s10, 1
      %p146 = scmp.lt.s32.totalorder %s15, 3
      %s147 = scalar_select %p146, %s15, 3
      %s148 = smul.addr %s147, 16
      %s149 = smul.addr %s148, 8
      %s150 = scalar_lea.vmem %s0, %s149
      %p151 = pneg %p36
      %p152 = pneg %p33
      %p153 = pneg %p57
      %p154 = pneg %p54
      %p155 = pneg %p83
      %p156 = pneg %p80
      %p157 = scmp.lt.s32.totalorder %s15, 3
      %s158 = scalar_select %p157, %s15, 3
      %s159 = smul.addr %s158, 16
      %s160 = smul.addr %s159, 8
      %s161 = scalar_lea.vmem %s2, %s160
      %p162 = pneg %p109
      %p163 = pneg %p106
      %p164 = scmp.lt.s32.totalorder %s15, 3
      %s165 = scalar_select %p164, %s15, 3
      %s166 = smul.addr %s165, 8
      %s167 = smul.addr %s166, 8
      %s168 = scalar_lea.vmem %s3, %s167
      %p169 = scmp.lt.s32.totalorder %s15, 3
      %s170 = scalar_select %p169, %s15, 3
      %s171 = smul.addr %s170, 16
      %s172 = smul.addr %s171, 8
      %s173 = scalar_lea.vmem %s0, %s172
      %p174 = scmp.lt.s32.totalorder %s15, 3
      %s175 = scalar_select %p174, %s15, 3
      %s176 = smul.addr %s175, 16
      %s177 = smul.addr %s176, 8
      %s178 = scalar_lea.vmem %s2, %s177
      %p179 = scmp.lt.s32.totalorder %s15, 3
      %s180 = scalar_select %p179, %s15, 3
      %s181 = smul.addr %s180, 8
      %s182 = smul.addr %s181, 8
      %s183 = scalar_lea.vmem %s3, %s182
      %v184 = vld [vmem:[%s173] sm:$0xff]
      %v185 = vld [vmem:[%s173 + $0x8] sm:$0xff]
      %v186 = vld [vmem:[%s173 + $0x10] sm:$0xff]
      %v187 = vld [vmem:[%s173 + $0x18] sm:$0xff]
      %v188 = vld [vmem:[%s173 + $0x20] sm:$0xff]
      %v189 = vld [vmem:[%s173 + $0x28] sm:$0xff]
      %v190 = vld [vmem:[%s173 + $0x30] sm:$0xff]
      %v191 = vld [vmem:[%s173 + $0x38] sm:$0xff]
      %v192 = vld [vmem:[%s173 + $0x40] sm:$0xff]
      %v193 = vld [vmem:[%s173 + $0x48] sm:$0xff]
      %v194 = vld [vmem:[%s173 + $0x50] sm:$0xff]
      %v195 = vld [vmem:[%s173 + $0x58] sm:$0xff]
      %v196 = vld [vmem:[%s173 + $0x60] sm:$0xff]
      %v197 = vld [vmem:[%s173 + $0x68] sm:$0xff]
      %v198 = vld [vmem:[%s173 + $0x70] sm:$0xff]
      %v199 = vld [vmem:[%s173 + $0x78] sm:$0xff]
      %216 = vrot.lane.b32.xlu0 %v184, 1
      %v217 = vpop.permute.xlu0 %216
      %218 = vrot.lane.b32.xlu0 %v185, 1
      %v219 = vpop.permute.xlu0 %218
      %220 = vrot.lane.b32.xlu0 %v186, 1
      %v221 = vpop.permute.xlu0 %220
      %222 = vrot.lane.b32.xlu0 %v187, 1
      %v223 = vpop.permute.xlu0 %222
      %224 = vrot.lane.b32.xlu0 %v188, 1
      %v225 = vpop.permute.xlu0 %224
      %226 = vrot.lane.b32.xlu0 %v189, 1
      %v227 = vpop.permute.xlu0 %226
      %228 = vrot.lane.b32.xlu0 %v190, 1
      %v229 = vpop.permute.xlu0 %228
      %230 = vrot.lane.b32.xlu0 %v191, 1
      %v231 = vpop.permute.xlu0 %230
      %232 = vrot.lane.b32.xlu0 %v192, 1
      %v233 = vpop.permute.xlu0 %232
      %234 = vrot.lane.b32.xlu0 %v193, 1
      %v235 = vpop.permute.xlu0 %234
      %236 = vrot.lane.b32.xlu0 %v194, 1
      %v237 = vpop.permute.xlu0 %236
      %238 = vrot.lane.b32.xlu0 %v195, 1
      %v239 = vpop.permute.xlu0 %238
      %240 = vrot.lane.b32.xlu0 %v196, 1
      %v241 = vpop.permute.xlu0 %240
      %242 = vrot.lane.b32.xlu0 %v197, 1
      %v243 = vpop.permute.xlu0 %242
      %244 = vrot.lane.b32.xlu0 %v198, 1
      %v245 = vpop.permute.xlu0 %244
      %246 = vrot.lane.b32.xlu0 %v199, 1
      %v247 = vpop.permute.xlu0 %246
      %vm248 = vcmask 7168
      %v249 = vsel %vm248, %v217, %v219
      %v250 = vsel %vm248, %v221, %v223
      %v251 = vsel %vm248, %v225, %v227
      %v252 = vsel %vm248, %v229, %v231
      %v253 = vsel %vm248, %v233, %v235
      %v254 = vsel %vm248, %v237, %v239
      %v255 = vsel %vm248, %v241, %v243
      %v256 = vsel %vm248, %v245, %v247
      %v273 = vsel %vm248, 0.0, %v217
      %v274 = vsel %vm248, 0.0, %v221
      %v275 = vsel %vm248, 0.0, %v225
      %v276 = vsel %vm248, 0.0, %v229
      %v277 = vsel %vm248, 0.0, %v233
      %v278 = vsel %vm248, 0.0, %v237
      %v279 = vsel %vm248, 0.0, %v241
      %v280 = vsel %vm248, 0.0, %v245
      %281 = vst [vmem:[#allocation2] sm:$0xff] %v273
      %282 = vst [vmem:[#allocation2 + $0x8] sm:$0xff] %v249
      %283 = vst [vmem:[#allocation2 + $0x10] sm:$0xff] %v274
      %284 = vst [vmem:[#allocation2 + $0x18] sm:$0xff] %v250
      %285 = vst [vmem:[#allocation2 + $0x20] sm:$0xff] %v275
      %286 = vst [vmem:[#allocation2 + $0x28] sm:$0xff] %v251
      %287 = vst [vmem:[#allocation2 + $0x30] sm:$0xff] %v276
      %288 = vst [vmem:[#allocation2 + $0x38] sm:$0xff] %v252
      %289 = vst [vmem:[#allocation2 + $0x40] sm:$0xff] %v277
      %290 = vst [vmem:[#allocation2 + $0x48] sm:$0xff] %v253
      %291 = vst [vmem:[#allocation2 + $0x50] sm:$0xff] %v278
      %292 = vst [vmem:[#allocation2 + $0x58] sm:$0xff] %v254
      %293 = vst [vmem:[#allocation2 + $0x60] sm:$0xff] %v279
      %294 = vst [vmem:[#allocation2 + $0x68] sm:$0xff] %v255
      %295 = vst [vmem:[#allocation2 + $0x70] sm:$0xff] %v280
      %296 = vst [vmem:[#allocation2 + $0x78] sm:$0xff] %v256
      %297 = vst [vmem:[#allocation2 + $0x80] sm:$0xff] %v184
      %298 = vst [vmem:[#allocation2 + $0x88] sm:$0xff] %v185
      %299 = vst [vmem:[#allocation2 + $0x90] sm:$0xff] %v186
      %300 = vst [vmem:[#allocation2 + $0x98] sm:$0xff] %v187
      %301 = vst [vmem:[#allocation2 + $0xa0] sm:$0xff] %v188
      %302 = vst [vmem:[#allocation2 + $0xa8] sm:$0xff] %v189
      %303 = vst [vmem:[#allocation2 + $0xb0] sm:$0xff] %v190
      %304 = vst [vmem:[#allocation2 + $0xb8] sm:$0xff] %v191
      %305 = vst [vmem:[#allocation2 + $0xc0] sm:$0xff] %v192
      %306 = vst [vmem:[#allocation2 + $0xc8] sm:$0xff] %v193
      %307 = vst [vmem:[#allocation2 + $0xd0] sm:$0xff] %v194
      %308 = vst [vmem:[#allocation2 + $0xd8] sm:$0xff] %v195
      %309 = vst [vmem:[#allocation2 + $0xe0] sm:$0xff] %v196
      %310 = vst [vmem:[#allocation2 + $0xe8] sm:$0xff] %v197
      %311 = vst [vmem:[#allocation2 + $0xf0] sm:$0xff] %v198
      %312 = vst [vmem:[#allocation2 + $0xf8] sm:$0xff] %v199
      %313 = vrot.lane.b32.xlu0 %v184, 127
      %v314 = vpop.permute.xlu0 %313
      %315 = vrot.lane.b32.xlu0 %v185, 127
      %v316 = vpop.permute.xlu0 %315
      %317 = vrot.lane.b32.xlu0 %v186, 127
      %v318 = vpop.permute.xlu0 %317
      %319 = vrot.lane.b32.xlu0 %v187, 127
      %v320 = vpop.permute.xlu0 %319
      %321 = vrot.lane.b32.xlu0 %v188, 127
      %v322 = vpop.permute.xlu0 %321
      %323 = vrot.lane.b32.xlu0 %v189, 127
      %v324 = vpop.permute.xlu0 %323
      %325 = vrot.lane.b32.xlu0 %v190, 127
      %v326 = vpop.permute.xlu0 %325
      %327 = vrot.lane.b32.xlu0 %v191, 127
      %v328 = vpop.permute.xlu0 %327
      %329 = vrot.lane.b32.xlu0 %v192, 127
      %v330 = vpop.permute.xlu0 %329
      %331 = vrot.lane.b32.xlu0 %v193, 127
      %v332 = vpop.permute.xlu0 %331
      %333 = vrot.lane.b32.xlu0 %v194, 127
      %v334 = vpop.permute.xlu0 %333
      %335 = vrot.lane.b32.xlu0 %v195, 127
      %v336 = vpop.permute.xlu0 %335
      %337 = vrot.lane.b32.xlu0 %v196, 127
      %v338 = vpop.permute.xlu0 %337
      %339 = vrot.lane.b32.xlu0 %v197, 127
      %v340 = vpop.permute.xlu0 %339
      %341 = vrot.lane.b32.xlu0 %v198, 127
      %v342 = vpop.permute.xlu0 %341
      %343 = vrot.lane.b32.xlu0 %v199, 127
      %v344 = vpop.permute.xlu0 %343
      %vm345 = vcmask 1039360
      %v346 = vsel %vm345, %v314, %v316
      %v347 = vsel %vm345, %v318, %v320
      %v348 = vsel %vm345, %v322, %v324
      %v349 = vsel %vm345, %v326, %v328
      %v350 = vsel %vm345, %v330, %v332
      %v351 = vsel %vm345, %v334, %v336
      %v352 = vsel %vm345, %v338, %v340
      %v353 = vsel %vm345, %v342, %v344
      %v370 = vsel %vm345, %v316, 0.0
      %v371 = vsel %vm345, %v320, 0.0
      %v372 = vsel %vm345, %v324, 0.0
      %v373 = vsel %vm345, %v328, 0.0
      %v374 = vsel %vm345, %v332, 0.0
      %v375 = vsel %vm345, %v336, 0.0
      %v376 = vsel %vm345, %v340, 0.0
      %v377 = vsel %vm345, %v344, 0.0
      %378 = vst [vmem:[#allocation2 + $0x100] sm:$0xff] %v346
      %379 = vst [vmem:[#allocation2 + $0x108] sm:$0xff] %v370
      %380 = vst [vmem:[#allocation2 + $0x110] sm:$0xff] %v347
      %381 = vst [vmem:[#allocation2 + $0x118] sm:$0xff] %v371
      %382 = vst [vmem:[#allocation2 + $0x120] sm:$0xff] %v348
      %383 = vst [vmem:[#allocation2 + $0x128] sm:$0xff] %v372
      %384 = vst [vmem:[#allocation2 + $0x130] sm:$0xff] %v349
      %385 = vst [vmem:[#allocation2 + $0x138] sm:$0xff] %v373
      %386 = vst [vmem:[#allocation2 + $0x140] sm:$0xff] %v350
      %387 = vst [vmem:[#allocation2 + $0x148] sm:$0xff] %v374
      %388 = vst [vmem:[#allocation2 + $0x150] sm:$0xff] %v351
      %389 = vst [vmem:[#allocation2 + $0x158] sm:$0xff] %v375
      %390 = vst [vmem:[#allocation2 + $0x160] sm:$0xff] %v352
      %391 = vst [vmem:[#allocation2 + $0x168] sm:$0xff] %v376
      %392 = vst [vmem:[#allocation2 + $0x170] sm:$0xff] %v353
      %393 = vst [vmem:[#allocation2 + $0x178] sm:$0xff] %v377
      %v394 = vld [vmem:[%s1] sm:$0xff]
      %v395 = vld [vmem:[%s1 + $0x8] sm:$0xff]
      %v396 = vld [vmem:[%s1 + $0x10] sm:$0xff]
      %v397 = vld [vmem:[%s1 + $0x18] sm:$0xff]
      %v398 = vld [vmem:[%s1 + $0x20] sm:$0xff]
      %v399 = vld [vmem:[%s1 + $0x28] sm:$0xff]
      %v400 = vld [vmem:[%s1 + $0x30] sm:$0xff]
      %v401 = vld [vmem:[%s1 + $0x38] sm:$0xff]
      %v402 = vld [vmem:[%s1 + $0x40] sm:$0xff]
      %v403 = vld [vmem:[%s1 + $0x48] sm:$0xff]
      %v404 = vld [vmem:[%s1 + $0x50] sm:$0xff]
      %v405 = vld [vmem:[%s1 + $0x58] sm:$0xff]
      %v406 = vld [vmem:[%s1 + $0x60] sm:$0xff]
      %v407 = vld [vmem:[%s1 + $0x68] sm:$0xff]
      %v408 = vld [vmem:[%s1 + $0x70] sm:$0xff]
      %v409 = vld [vmem:[%s1 + $0x78] sm:$0xff]
      %v410 = vld [vmem:[#allocation2] sm:$0xff]
      %v411 = vld [vmem:[#allocation2 + $0x8] sm:$0xff]
      %v412 = vld [vmem:[#allocation2 + $0x10] sm:$0xff]
      %v413 = vld [vmem:[#allocation2 + $0x18] sm:$0xff]
      %v414 = vld [vmem:[#allocation2 + $0x20] sm:$0xff]
      %v415 = vld [vmem:[#allocation2 + $0x28] sm:$0xff]
      %v416 = vld [vmem:[#allocation2 + $0x30] sm:$0xff]
      %v417 = vld [vmem:[#allocation2 + $0x38] sm:$0xff]
      %v418 = vld [vmem:[#allocation2 + $0x40] sm:$0xff]
      %v419 = vld [vmem:[#allocation2 + $0x48] sm:$0xff]
      %v420 = vld [vmem:[#allocation2 + $0x50] sm:$0xff]
      %v421 = vld [vmem:[#allocation2 + $0x58] sm:$0xff]
      %v422 = vld [vmem:[#allocation2 + $0x60] sm:$0xff]
      %v423 = vld [vmem:[#allocation2 + $0x68] sm:$0xff]
      %v424 = vld [vmem:[#allocation2 + $0x70] sm:$0xff]
      %v425 = vld [vmem:[#allocation2 + $0x78] sm:$0xff]
      %v426 = vld [vmem:[#allocation2 + $0x80] sm:$0xff]
      %v427 = vld [vmem:[#allocation2 + $0x88] sm:$0xff]
      %v428 = vld [vmem:[#allocation2 + $0x90] sm:$0xff]
      %v429 = vld [vmem:[#allocation2 + $0x98] sm:$0xff]
      %v430 = vld [vmem:[#allocation2 + $0xa0] sm:$0xff]
      %v431 = vld [vmem:[#allocation2 + $0xa8] sm:$0xff]
      %v432 = vld [vmem:[#allocation2 + $0xb0] sm:$0xff]
      %v433 = vld [vmem:[#allocation2 + $0xb8] sm:$0xff]
      %v434 = vld [vmem:[#allocation2 + $0xc0] sm:$0xff]
      %v435 = vld [vmem:[#allocation2 + $0xc8] sm:$0xff]
      %v436 = vld [vmem:[#allocation2 + $0xd0] sm:$0xff]
      %v437 = vld [vmem:[#allocation2 + $0xd8] sm:$0xff]
      %v438 = vld [vmem:[#allocation2 + $0xe0] sm:$0xff]
      %v439 = vld [vmem:[#allocation2 + $0xe8] sm:$0xff]
      %v440 = vld [vmem:[#allocation2 + $0xf0] sm:$0xff]
      %v441 = vld [vmem:[#allocation2 + $0xf8] sm:$0xff]
      %v442 = vld [vmem:[#allocation2 + $0x100] sm:$0xff]
      %v443 = vld [vmem:[#allocation2 + $0x108] sm:$0xff]
      %v444 = vld [vmem:[#allocation2 + $0x110] sm:$0xff]
      %v445 = vld [vmem:[#allocation2 + $0x118] sm:$0xff]
      %v446 = vld [vmem:[#allocation2 + $0x120] sm:$0xff]
      %v447 = vld [vmem:[#allocation2 + $0x128] sm:$0xff]
      %v448 = vld [vmem:[#allocation2 + $0x130] sm:$0xff]
      %v449 = vld [vmem:[#allocation2 + $0x138] sm:$0xff]
      %v450 = vld [vmem:[#allocation2 + $0x140] sm:$0xff]
      %v451 = vld [vmem:[#allocation2 + $0x148] sm:$0xff]
      %v452 = vld [vmem:[#allocation2 + $0x150] sm:$0xff]
      %v453 = vld [vmem:[#allocation2 + $0x158] sm:$0xff]
      %v454 = vld [vmem:[#allocation2 + $0x160] sm:$0xff]
      %v455 = vld [vmem:[#allocation2 + $0x168] sm:$0xff]
      %v456 = vld [vmem:[#allocation2 + $0x170] sm:$0xff]
      %v457 = vld [vmem:[#allocation2 + $0x178] sm:$0xff]
      %vm458 = vcmask 523264
      %v460 = vsel %vm458, %v395, 0
      %v463 = vsel %vm458, %v397, 0
      %v466 = vsel %vm458, %v399, 0
      %v469 = vsel %vm458, %v401, 0
      %v472 = vsel %vm458, %v403, 0
      %v475 = vsel %vm458, %v405, 0
      %v478 = vsel %vm458, %v407, 0
      %v481 = vsel %vm458, %v409, 0
      %483 = vmatpush.msra.mxu0 %v440
      %484 = vmatpush.msra.mxu0 %v438
      %485 = vmatpush.msra.mxu0 %v436
      %486 = vmatpush.msra.mxu0 %v434
      %487 = vmatpush.msra.mxu0 %v432
      %488 = vmatpush.msra.mxu0 %v430
      %489 = vmatpush.msra.mxu0 %v428
      %490 = vmatpush.msra.mxu0 %v426
      %491 = vmatpush.msra.mxu0 %v424
      %492 = vmatpush.msra.mxu0 %v422
      %493 = vmatpush.msra.mxu0 %v420
      %494 = vmatpush.msra.mxu0 %v418
      %495 = vmatpush.msra.mxu0 %v416
      %496 = vmatpush.msra.mxu0 %v414
      %497 = vmatpush.msra.mxu0 %v412
      %498 = vmatpush.msra.mxu0 %v410
      %499 = vmatmul.f32.gmra.mxu0 %v394
      %v500 = vpop.f32.mrf.mxu0
      %v501 = vadd.f32 0.0, %v500
      %502 = vmatmul.f32.gmra.mxu0 %v396
      %v503 = vpop.f32.mrf.mxu0
      %v504 = vadd.f32 0.0, %v503
      %505 = vmatmul.f32.gmra.mxu0 %v398
      %v506 = vpop.f32.mrf.mxu0
      %v507 = vadd.f32 0.0, %v506
      %508 = vmatmul.f32.gmra.mxu0 %v400
      %v509 = vpop.f32.mrf.mxu0
      %v510 = vadd.f32 0.0, %v509
      %511 = vmatmul.f32.gmra.mxu0 %v402
      %v512 = vpop.f32.mrf.mxu0
      %v513 = vadd.f32 0.0, %v512
      %514 = vmatmul.f32.gmra.mxu0 %v404
      %v515 = vpop.f32.mrf.mxu0
      %v516 = vadd.f32 0.0, %v515
      %517 = vmatmul.f32.gmra.mxu0 %v406
      %v518 = vpop.f32.mrf.mxu0
      %v519 = vadd.f32 0.0, %v518
      %520 = vmatmul.f32.gmra.mxu0 %v408
      %v521 = vpop.f32.mrf.mxu0
      %v522 = vadd.f32 0.0, %v521
      %523 = vdwg.mxu0
      %524 = vmatpush.msra.mxu0 0.0
      %525 = vmatpush.msra.mxu0 0.0
      %526 = vmatpush.msra.mxu0 0.0
      %527 = vmatpush.msra.mxu0 0.0
      %528 = vmatpush.msra.mxu0 0.0
      %529 = vmatpush.msra.mxu0 0.0
      %530 = vmatpush.msra.mxu0 0.0
      %531 = vmatpush.msra.mxu0 0.0
      %532 = vmatpush.msra.mxu0 %v456
      %533 = vmatpush.msra.mxu0 %v454
      %534 = vmatpush.msra.mxu0 %v452
      %535 = vmatpush.msra.mxu0 %v450
      %536 = vmatpush.msra.mxu0 %v448
      %537 = vmatpush.msra.mxu0 %v446
      %538 = vmatpush.msra.mxu0 %v444
      %539 = vmatpush.msra.mxu0 %v442
      %540 = vmatmul.f32.gmra.mxu0 %v460
      %v541 = vpop.f32.mrf.mxu0
      %v542 = vadd.f32 %v501, %v541
      %543 = vmatmul.f32.gmra.mxu0 %v463
      %v544 = vpop.f32.mrf.mxu0
      %v545 = vadd.f32 %v504, %v544
      %546 = vmatmul.f32.gmra.mxu0 %v466
      %v547 = vpop.f32.mrf.mxu0
      %v548 = vadd.f32 %v507, %v547
      %549 = vmatmul.f32.gmra.mxu0 %v469
      %v550 = vpop.f32.mrf.mxu0
      %v551 = vadd.f32 %v510, %v550
      %552 = vmatmul.f32.gmra.mxu0 %v472
      %v553 = vpop.f32.mrf.mxu0
      %v554 = vadd.f32 %v513, %v553
      %555 = vmatmul.f32.gmra.mxu0 %v475
      %v556 = vpop.f32.mrf.mxu0
      %v557 = vadd.f32 %v516, %v556
      %558 = vmatmul.f32.gmra.mxu0 %v478
      %v559 = vpop.f32.mrf.mxu0
      %v560 = vadd.f32 %v519, %v559
      %561 = vmatmul.f32.gmra.mxu0 %v481
      %v562 = vpop.f32.mrf.mxu0
      %v563 = vadd.f32 %v522, %v562
      %564 = vdwg.mxu0
      %565 = vmatpush.msra.mxu0 %v441
      %566 = vmatpush.msra.mxu0 %v439
      %567 = vmatpush.msra.mxu0 %v437
      %568 = vmatpush.msra.mxu0 %v435
      %569 = vmatpush.msra.mxu0 %v433
      %570 = vmatpush.msra.mxu0 %v431
      %571 = vmatpush.msra.mxu0 %v429
      %572 = vmatpush.msra.mxu0 %v427
      %573 = vmatpush.msra.mxu0 %v425
      %574 = vmatpush.msra.mxu0 %v423
      %575 = vmatpush.msra.mxu0 %v421
      %576 = vmatpush.msra.mxu0 %v419
      %577 = vmatpush.msra.mxu0 %v417
      %578 = vmatpush.msra.mxu0 %v415
      %579 = vmatpush.msra.mxu0 %v413
      %580 = vmatpush.msra.mxu0 %v411
      %581 = vmatmul.f32.gmra.mxu0 %v394
      %v582 = vpop.f32.mrf.mxu0
      %v583 = vadd.f32 0.0, %v582
      %584 = vmatmul.f32.gmra.mxu0 %v396
      %v585 = vpop.f32.mrf.mxu0
      %v586 = vadd.f32 0.0, %v585
      %587 = vmatmul.f32.gmra.mxu0 %v398
      %v588 = vpop.f32.mrf.mxu0
      %v589 = vadd.f32 0.0, %v588
      %590 = vmatmul.f32.gmra.mxu0 %v400
      %v591 = vpop.f32.mrf.mxu0
      %v592 = vadd.f32 0.0, %v591
      %593 = vmatmul.f32.gmra.mxu0 %v402
      %v594 = vpop.f32.mrf.mxu0
      %v595 = vadd.f32 0.0, %v594
      %596 = vmatmul.f32.gmra.mxu0 %v404
      %v597 = vpop.f32.mrf.mxu0
      %v598 = vadd.f32 0.0, %v597
      %599 = vmatmul.f32.gmra.mxu0 %v406
      %v600 = vpop.f32.mrf.mxu0
      %v601 = vadd.f32 0.0, %v600
      %602 = vmatmul.f32.gmra.mxu0 %v408
      %v603 = vpop.f32.mrf.mxu0
      %v604 = vadd.f32 0.0, %v603
      %605 = vdwg.mxu0
      %606 = vmatpush.msra.mxu0 0.0
      %607 = vmatpush.msra.mxu0 0.0
      %608 = vmatpush.msra.mxu0 0.0
      %609 = vmatpush.msra.mxu0 0.0
      %610 = vmatpush.msra.mxu0 0.0
      %611 = vmatpush.msra.mxu0 0.0
      %612 = vmatpush.msra.mxu0 0.0
      %613 = vmatpush.msra.mxu0 0.0
      %614 = vmatpush.msra.mxu0 %v457
      %615 = vmatpush.msra.mxu0 %v455
      %616 = vmatpush.msra.mxu0 %v453
      %617 = vmatpush.msra.mxu0 %v451
      %618 = vmatpush.msra.mxu0 %v449
      %619 = vmatpush.msra.mxu0 %v447
      %620 = vmatpush.msra.mxu0 %v445
      %621 = vmatpush.msra.mxu0 %v443
      %622 = vmatmul.f32.gmra.mxu0 %v460
      %v623 = vpop.f32.mrf.mxu0
      %v624 = vadd.f32 %v583, %v623
      %625 = vmatmul.f32.gmra.mxu0 %v463
      %v626 = vpop.f32.mrf.mxu0
      %v627 = vadd.f32 %v586, %v626
      %628 = vmatmul.f32.gmra.mxu0 %v466
      %v629 = vpop.f32.mrf.mxu0
      %v630 = vadd.f32 %v589, %v629
      %631 = vmatmul.f32.gmra.mxu0 %v469
      %v632 = vpop.f32.mrf.mxu0
      %v633 = vadd.f32 %v592, %v632
      %634 = vmatmul.f32.gmra.mxu0 %v472
      %v635 = vpop.f32.mrf.mxu0
      %v636 = vadd.f32 %v595, %v635
      %637 = vmatmul.f32.gmra.mxu0 %v475
      %v638 = vpop.f32.mrf.mxu0
      %v639 = vadd.f32 %v598, %v638
      %640 = vmatmul.f32.gmra.mxu0 %v478
      %v641 = vpop.f32.mrf.mxu0
      %v642 = vadd.f32 %v601, %v641
      %643 = vmatmul.f32.gmra.mxu0 %v481
      %v644 = vpop.f32.mrf.mxu0
      %v645 = vadd.f32 %v604, %v644
      %646 = vdwg.mxu0
      %647 = vst [vmem:[%s178] sm:$0xff] %v542
      %648 = vst [vmem:[%s178 + $0x8] sm:$0xff] %v624
      %649 = vst [vmem:[%s178 + $0x10] sm:$0xff] %v545
      %650 = vst [vmem:[%s178 + $0x18] sm:$0xff] %v627
      %651 = vst [vmem:[%s178 + $0x20] sm:$0xff] %v548
      %652 = vst [vmem:[%s178 + $0x28] sm:$0xff] %v630
      %653 = vst [vmem:[%s178 + $0x30] sm:$0xff] %v551
      %654 = vst [vmem:[%s178 + $0x38] sm:$0xff] %v633
      %655 = vst [vmem:[%s178 + $0x40] sm:$0xff] %v554
      %656 = vst [vmem:[%s178 + $0x48] sm:$0xff] %v636
      %657 = vst [vmem:[%s178 + $0x50] sm:$0xff] %v557
      %658 = vst [vmem:[%s178 + $0x58] sm:$0xff] %v639
      %659 = vst [vmem:[%s178 + $0x60] sm:$0xff] %v560
      %660 = vst [vmem:[%s178 + $0x68] sm:$0xff] %v642
      %661 = vst [vmem:[%s178 + $0x70] sm:$0xff] %v563
      %662 = vst [vmem:[%s178 + $0x78] sm:$0xff] %v645
      %v663 = vadd.f32 %v542, %v624
      %664 = vadd.xlane.f32.xlu0 %v663
      %v665 = vpop.xlane.xlu0 %664
      %v666 = vadd.f32 %v545, %v627
      %667 = vadd.xlane.f32.xlu0 %v666
      %v668 = vpop.xlane.xlu0 %667
      %v669 = vadd.f32 %v548, %v630
      %670 = vadd.xlane.f32.xlu0 %v669
      %v671 = vpop.xlane.xlu0 %670
      %v672 = vadd.f32 %v551, %v633
      %673 = vadd.xlane.f32.xlu0 %v672
      %v674 = vpop.xlane.xlu0 %673
      %v675 = vadd.f32 %v554, %v636
      %676 = vadd.xlane.f32.xlu0 %v675
      %v677 = vpop.xlane.xlu0 %676
      %v678 = vadd.f32 %v557, %v639
      %679 = vadd.xlane.f32.xlu0 %v678
      %v680 = vpop.xlane.xlu0 %679
      %v681 = vadd.f32 %v560, %v642
      %682 = vadd.xlane.f32.xlu0 %v681
      %v683 = vpop.xlane.xlu0 %682
      %v684 = vadd.f32 %v563, %v645
      %685 = vadd.xlane.f32.xlu0 %v684
      %v686 = vpop.xlane.xlu0 %685
      %v687 = vmul.f32 %v542, %v542
      %v688 = vmul.f32 %v624, %v624
      %v689 = vmul.f32 %v545, %v545
      %v690 = vmul.f32 %v627, %v627
      %v691 = vmul.f32 %v548, %v548
      %v692 = vmul.f32 %v630, %v630
      %v693 = vmul.f32 %v551, %v551
      %v694 = vmul.f32 %v633, %v633
      %v695 = vmul.f32 %v554, %v554
      %v696 = vmul.f32 %v636, %v636
      %v697 = vmul.f32 %v557, %v557
      %v698 = vmul.f32 %v639, %v639
      %v699 = vmul.f32 %v560, %v560
      %v700 = vmul.f32 %v642, %v642
      %v701 = vmul.f32 %v563, %v563
      %v702 = vmul.f32 %v645, %v645
      %v703 = vadd.f32 %v687, %v688
      %704 = vadd.xlane.f32.xlu0 %v703
      %v705 = vpop.xlane.xlu0 %704
      %v706 = vadd.f32 %v689, %v690
      %707 = vadd.xlane.f32.xlu0 %v706
      %v708 = vpop.xlane.xlu0 %707
      %v709 = vadd.f32 %v691, %v692
      %710 = vadd.xlane.f32.xlu0 %v709
      %v711 = vpop.xlane.xlu0 %710
      %v712 = vadd.f32 %v693, %v694
      %713 = vadd.xlane.f32.xlu0 %v712
      %v714 = vpop.xlane.xlu0 %713
      %v715 = vadd.f32 %v695, %v696
      %716 = vadd.xlane.f32.xlu0 %v715
      %v717 = vpop.xlane.xlu0 %716
      %v718 = vadd.f32 %v697, %v698
      %719 = vadd.xlane.f32.xlu0 %v718
      %v720 = vpop.xlane.xlu0 %719
      %v721 = vadd.f32 %v699, %v700
      %722 = vadd.xlane.f32.xlu0 %v721
      %v723 = vpop.xlane.xlu0 %722
      %v724 = vadd.f32 %v701, %v702
      %725 = vadd.xlane.f32.xlu0 %v724
      %v726 = vpop.xlane.xlu0 %725
      %v727 = vsel %vm248, %v665, %v705
      %v728 = vsel %vm248, %v668, %v708
      %v729 = vsel %vm248, %v671, %v711
      %v730 = vsel %vm248, %v674, %v714
      %v731 = vsel %vm248, %v677, %v717
      %v732 = vsel %vm248, %v680, %v720
      %v733 = vsel %vm248, %v683, %v723
      %v734 = vsel %vm248, %v686, %v726
      %vm735 = vcmask 15360
      %736 = vst.msk [vmem:[%s183] sm:$0xff] %vm735, %v727
      %737 = vst.msk [vmem:[%s183 + $0x8] sm:$0xff] %vm735, %v728
      %738 = vst.msk [vmem:[%s183 + $0x10] sm:$0xff] %vm735, %v729
      %739 = vst.msk [vmem:[%s183 + $0x18] sm:$0xff] %vm735, %v730
      %740 = vst.msk [vmem:[%s183 + $0x20] sm:$0xff] %vm735, %v731
      %741 = vst.msk [vmem:[%s183 + $0x28] sm:$0xff] %vm735, %v732
      %742 = vst.msk [vmem:[%s183 + $0x30] sm:$0xff] %vm735, %v733
      %743 = vst.msk [vmem:[%s183 + $0x38] sm:$0xff] %vm735, %v734
      %p744 = scmp.lt.s32.totalorder %s15, 3
      %s745 = scalar_select %p744, %s15, 3
      %s746 = smul.addr %s745, 16
      %s747 = smul.addr %s746, 8
      %s748 = scalar_lea.vmem %s2, %s747
      %p749 = scmp.lt.s32.totalorder %s15, 3
      %s750 = scalar_select %p749, %s15, 3
      %s751 = smul.addr %s750, 8
      %s752 = smul.addr %s751, 8
      %s753 = scalar_lea.vmem %s3, %s752
      // Predicated region
      $region29: #{residual_block.3} parent=27 // pred_check
        %p754 = pneg %p80
      $region30: #{residual_block.3} parent=27 // pred_check_branch
        %756 = sbr.rel (%p754) target = $region32
      $region31: #{residual_block.3} parent=27 // pred_region
        _
      $region32: #{residual_block.3} parent=27 // pred_fallthru
        _
      // Predicated region
      $region33: #{residual_block.3} parent=27 // pred_check
        %p757 = pneg %p106
      $region34: #{residual_block.3} parent=27 // pred_check_branch
        %759 = sbr.rel (%p757) target = $region36
      $region35: #{residual_block.3} parent=27 // pred_region
        _
      $region36: #{residual_block.3} parent=27 // pred_fallthru
        _
    $region28: #{residual_block.3} parent=5 // pred_fallthru
      _
    %p760 = scmp.le.s32.totalorder 2, %s10
    // Predicated region
    $region37: #{residual_block.3} parent=5 // pred_check
      %p761 = pneg %p760
    $region38: #{residual_block.3} parent=5 // pred_check_branch
      %763 = sbr.rel (%p761) target = $region40
    $region39: #{residual_block.3} parent=5 // pred_region
      %s764 = ssub.s32 %s10, 2
      // Predicated region
      $region41: #{residual_block.3} parent=39 // pred_check
        %p765 = pneg %p86
      $region42: #{residual_block.3} parent=39 // pred_check_branch
        %767 = sbr.rel (%p765) target = $region44
      $region43: #{residual_block.3} parent=39 // pred_region
        %p768 = scmp.lt.s32.totalorder %s16, 3
        %s769 = scalar_select %p768, %s16, 3
        %s770 = smul.addr %s769, 16
        %s771 = smul.addr %s770, 8
        %s772 = scalar_lea.vmem %s2, %s771
      $region44: #{residual_block.3} parent=39 // pred_fallthru
        _
      // Predicated region
      $region45: #{residual_block.3} parent=39 // pred_check
        %p773 = pneg %p112
      $region46: #{residual_block.3} parent=39 // pred_check_branch
        %775 = sbr.rel (%p773) target = $region48
      $region47: #{residual_block.3} parent=39 // pred_region
        %p776 = scmp.lt.s32.totalorder %s16, 3
        %s777 = scalar_select %p776, %s16, 3
        %s778 = smul.addr %s777, 8
        %s779 = smul.addr %s778, 8
        %s780 = scalar_lea.vmem %s3, %s779
      $region48: #{residual_block.3} parent=39 // pred_fallthru
        _
    $region40: #{residual_block.3} parent=5 // pred_fallthru
      _
  $region6: #{residual_block.3} parent=0 // loop_footer
    %s14 = sadd.s32 1, %s10
  $region7: #{residual_block.3} parent=0 // loop_footer_branch
    %9 = sbr.rel target = $region3
  $region8: #{residual_block.3} parent=0 // loop_exit
    _

// kernel: residual_block.4
$region0: #{residual_block.4}
  #allocation0 [shape = 'u32[]', space=smem, size = 0x4, offset = 0x4, fixed_abs, tag = 'smem constant byte address 0x4 - core index']
  #allocation1 [shape = 'u32[72,128]{1,0:T(1,128)}', space=vmem, size = 0x9000, scoped, tag = 'internal scratch']
  #allocation2 [shape = 'f32[192,256]{1,0:T(8,128)}', space=vmem, size = 0x30000, scoped, tag = 'scratch operand']
  %s0 = inlined_call_operand.vmem [shape: f32[4,64,256], index: 0, kind: input, shape index: {}]
  %s1 = inlined_call_operand.vmem [shape: f32[64,1], index: 1, kind: input, shape index: {}]
  %s2 = inlined_call_operand.vmem [shape: f32[64,1], index: 2, kind: input, shape index: {}]
  %s3 = inlined_call_operand.vmem [shape: f32[64,192], index: 3, kind: input, shape index: {}]
  %s4 = inlined_call_operand.vmem [shape: f32[4,64,256], index: 4, kind: output, shape index: {0}]
  %s5 = inlined_call_operand.vmem [shape: f32[4,64,2], index: 5, kind: output, shape index: {1}]
  %6 = xla_tuple %s4, %s5
  %s7 = sld [smem:[#allocation0]]
  $region57: #{residual_block.4} parent=0
    _
  %s9 = ssub.s32 1, %s7
  %s10 = scalar_select 0, %s9, %s7
  loop: start=0, step=1, limit=6
  $region2: #{residual_block.4} parent=0 // loop_pre_header
    _
  $region3: #{residual_block.4} parent=0 // loop_header
    %s12 = sphi 0, %s16
    %p13 = scmp.ge.s32.totalorder %s12, 6
    %s22 = sphi 0, %s24
    %s25 = sphi 0, %s22
    %s26 = sphi 0, %s25
    %s42 = sphi 0, %s26
    %s46 = sphi 0, %s46
    %s48 = sphi 0, %s46
    %s49 = sphi 0, %s48
    %s63 = sphi 0, %s49
    %s67 = sphi 0, %s67
    %s69 = sphi 0, %s67
    %s70 = sphi 0, %s69
    %s84 = sphi 0, %s70
    %s88 = sphi 0, %s88
    %s90 = sphi 0, %s88
    %s91 = sphi 0, %s90
    %s105 = sphi 0, %s91
    %s111 = sphi 0, %s113
    %s114 = sphi 0, %s111
    %s115 = sphi 0, %s114
    %s131 = sphi 0, %s115
    %s137 = sphi 0, %s139
    %s140 = sphi 0, %s137
    %s141 = sphi 0, %s140
    %s157 = sphi 0, %s141
  $region4: #{residual_block.4} parent=0 // loop_header_branch
    %15 = sbr.rel (%p13) target = $region8
  $region5: #{residual_block.4} parent=0 // loop_body
    %s17 = ssub.s32 %s12, 1
    %s18 = ssub.s32 %s12, 2
    %s19 = sadd.s32 %s12, 1
    %s20 = ssub.s32 %s12, %s19
    %p21 = scmp.eq.s32.totalorder %s20, 0
    %s23 = sadd.s32 %s22, 1
    %s24 = scalar_select %p21, %s22, %s23
    %p27 = pneg %p21
    %p28 = scmp.eq.s32.totalorder %s12, 3
    %p29 = por %p27, %p28
    %p30 = scmp.ne.s32.totalorder %s22, %s25
    %p31 = scmp.eq.s32.totalorder %s12, 0
    %p32 = por %p30, %p31
    %p33 = scmp.ne.s32.totalorder %s22, %s25
    %p34 = scmp.eq.s32.totalorder %s17, 3
    %p35 = por %p33, %p34
    %p36 = scmp.ne.s32.totalorder %s25, %s26
    %p37 = scmp.eq.s32.totalorder %s17, 0
    %p38 = por %p36, %p37
    %p39 = scmp.ne.s32.totalorder %s25, %s26
    %p40 = scmp.eq.s32.totalorder %s18, 3
    %p41 = por %p39, %p40
    %p43 = scmp.ne.s32.totalorder %s26, %s42
    %p44 = scmp.eq.s32.totalorder %s18, 0
    %p45 = por %p43, %p44
    %s47 = sadd.s32 %s46, 1
    %p50 = scmp.eq.s32.totalorder %s12, 3
    %p51 = scmp.ne.s32.totalorder %s46, %s48
    %p52 = scmp.eq.s32.totalorder %s12, 0
    %p53 = por %p51, %p52
    %p54 = scmp.ne.s32.totalorder %s46, %s48
    %p55 = scmp.eq.s32.totalorder %s17, 3
    %p56 = por %p54, %p55
    %p57 = scmp.ne.s32.totalorder %s48, %s49
    %p58 = scmp.eq.s32.totalorder %s17, 0
    %p59 = por %p57, %p58
    %p60 = scmp.ne.s32.totalorder %s48, %s49
    %p61 = scmp.eq.s32.totalorder %s18, 3
    %p62 = por %p60, %p61
    %p64 = scmp.ne.s32.totalorder %s49, %s63
    %p65 = scmp.eq.s32.totalorder %s18, 0
    %p66 = por %p64, %p65
    %s68 = sadd.s32 %s67, 1
    %p71 = scmp.eq.s32.totalorder %s12, 3
    %p72 = scmp.ne.s32.totalorder %s67, %s69
    %p73 = scmp.eq.s32.totalorder %s12, 0
    %p74 = por %p72, %p73
    %p75 = scmp.ne.s32.totalorder %s67, %s69
    %p76 = scmp.eq.s32.totalorder %s17, 3
    %p77 = por %p75, %p76
    %p78 = scmp.ne.s32.totalorder %s69, %s70
    %p79 = scmp.eq.s32.totalorder %s17, 0
    %p80 = por %p78, %p79
    %p81 = scmp.ne.s32.totalorder %s69, %s70
    %p82 = scmp.eq.s32.totalorder %s18, 3
    %p83 = por %p81, %p82
    %p85 = scmp.ne.s32.totalorder %s70, %s84
    %p86 = scmp.eq.s32.totalorder %s18, 0
    %p87 = por %p85, %p86
    %s89 = sadd.s32 %s88, 1
    %p92 = scmp.eq.s32.totalorder %s12, 3
    %p93 = scmp.ne.s32.totalorder %s88, %s90
    %p94 = scmp.eq.s32.totalorder %s12, 0
    %p95 = por %p93, %p94
    %p96 = scmp.ne.s32.totalorder %s88, %s90
    %p97 = scmp.eq.s32.totalorder %s17, 3
    %p98 = por %p96, %p97
    %p99 = scmp.ne.s32.totalorder %s90, %s91
    %p100 = scmp.eq.s32.totalorder %s17, 0
    %p101 = por %p99, %p100
    %p102 = scmp.ne.s32.totalorder %s90, %s91
    %p103 = scmp.eq.s32.totalorder %s18, 3
    %p104 = por %p102, %p103
    %p106 = scmp.ne.s32.totalorder %s91, %s105
    %p107 = scmp.eq.s32.totalorder %s18, 0
    %p108 = por %p106, %p107
    %s109 = ssub.s32 %s12, %s19
    %p110 = scmp.eq.s32.totalorder %s109, 0
    %s112 = sadd.s32 %s111, 1
    %s113 = scalar_select %p110, %s111, %s112
    %p116 = pneg %p110
    %p117 = scmp.eq.s32.totalorder %s12, 3
    %p118 = por %p116, %p117
    %p119 = scmp.ne.s32.totalorder %s111, %s114
    %p120 = scmp.eq.s32.totalorder %s12, 0
    %p121 = por %p119, %p120
    %p122 = scmp.ne.s32.totalorder %s111, %s114
    %p123 = scmp.eq.s32.totalorder %s17, 3
    %p124 = por %p122, %p123
    %p125 = scmp.ne.s32.totalorder %s114, %s115
    %p126 = scmp.eq.s32.totalorder %s17, 0
    %p127 = por %p125, %p126
    %p128 = scmp.ne.s32.totalorder %s114, %s115
    %p129 = scmp.eq.s32.totalorder %s18, 3
    %p130 = por %p128, %p129
    %p132 = scmp.ne.s32.totalorder %s115, %s131
    %p133 = scmp.eq.s32.totalorder %s18, 0
    %p134 = por %p132, %p133
    %s135 = ssub.s32 %s12, %s19
    %p136 = scmp.eq.s32.totalorder %s135, 0
    %s138 = sadd.s32 %s137, 1
    %s139 = scalar_select %p136, %s137, %s138
    %p142 = pneg %p136
    %p143 = scmp.eq.s32.totalorder %s12, 3
    %p144 = por %p142, %p143
    %p145 = scmp.ne.s32.totalorder %s137, %s140
    %p146 = scmp.eq.s32.totalorder %s12, 0
    %p147 = por %p145, %p146
    %p148 = scmp.ne.s32.totalorder %s137, %s140
    %p149 = scmp.eq.s32.totalorder %s17, 3
    %p150 = por %p148, %p149
    %p151 = scmp.ne.s32.totalorder %s140, %s141
    %p152 = scmp.eq.s32.totalorder %s17, 0
    %p153 = por %p151, %p152
    %p154 = scmp.ne.s32.totalorder %s140, %s141
    %p155 = scmp.eq.s32.totalorder %s18, 3
    %p156 = por %p154, %p155
    %p158 = scmp.ne.s32.totalorder %s141, %s157
    %p159 = scmp.eq.s32.totalorder %s18, 0
    %p160 = por %p158, %p159
    %p161 = scmp.le.s32.totalorder 1, %s12
    %p162 = scmp.lt.s32.totalorder %s12, 5
    %p163 = pnand %p161, %p162
    %p164 = pneg %p163
    // Predicated region
    $region9: #{residual_block.4} parent=5 // pred_check
      _
    $region10: #{residual_block.4} parent=5 // pred_check_branch
      %166 = sbr.rel (%p163) target = $region12
    $region11: #{residual_block.4} parent=5 // pred_region
      %s167 = ssub.s32 %s12, 1
      // Predicated region
      $region13: #{residual_block.4} parent=11 // pred_check
        %p168 = pneg %p59
      $region14: #{residual_block.4} parent=11 // pred_check_branch
        %170 = sbr.rel (%p168) target = $region16
      $region15: #{residual_block.4} parent=11 // pred_region
        _
      $region16: #{residual_block.4} parent=11 // pred_fallthru
        _
      // Predicated region
      $region17: #{residual_block.4} parent=11 // pred_check
        %p171 = pneg %p80
      $region18: #{residual_block.4} parent=11 // pred_check_branch
        %173 = sbr.rel (%p171) target = $region20
      $region19: #{residual_block.4} parent=11 // pred_region
        _
      $region20: #{residual_block.4} parent=11 // pred_fallthru
        _
      // Predicated region
      $region21: #{residual_block.4} parent=11 // pred_check
        %p174 = pneg %p101
      $region22: #{residual_block.4} parent=11 // pred_check_branch
        %176 = sbr.rel (%p174) target = $region24
      $region23: #{residual_block.4} parent=11 // pred_region
        _
      $region24: #{residual_block.4} parent=11 // pred_fallthru
        _
    $region12: #{residual_block.4} parent=5 // pred_fallthru
      _
    %p177 = scmp.lt.s32.totalorder %s12, 4
    // Predicated region
    $region25: #{residual_block.4} parent=5 // pred_check
      %p178 = pneg %p177
    $region26: #{residual_block.4} parent=5 // pred_check_branch
      %180 = sbr.rel (%p178) target = $region28
    $region27: #{residual_block.4} parent=5 // pred_region
      // Predicated region
      $region29: #{residual_block.4} parent=27 // pred_check
        %p181 = pneg %p32
      $region30: #{residual_block.4} parent=27 // pred_check_branch
        %183 = sbr.rel (%p181) target = $region32
      $region31: #{residual_block.4} parent=27 // pred_region
        %p184 = scmp.lt.s32.totalorder %s12, 3
        %s185 = scalar_select %p184, %s12, 3
        %s186 = smul.addr %s185, 16
        %s187 = smul.addr %s186, 8
        %s188 = scalar_lea.vmem %s0, %s187
      $region32: #{residual_block.4} parent=27 // pred_fallthru
        _
    $region28: #{residual_block.4} parent=5 // pred_fallthru
      _
    %p189 = scmp.le.s32.totalorder 1, %s12
    %p190 = scmp.lt.s32.totalorder %s12, 5
    %p191 = pnand %p189, %p190
    %p192 = pneg %p191
    // Predicated region
    $region33: #{residual_block.4} parent=5 // pred_check
      _
    $region34: #{residual_block.4} parent=5 // pred_check_branch
      %194 = sbr.rel (%p191) target = $region36
    $region35: #{residual_block.4} parent=5 // pred_region
      %s195 = ssub.s32 %s12, 1
      %p196 = scmp.lt.s32.totalorder %s17, 3
      %s197 = scalar_select %p196, %s17, 3
      %s198 = smul.addr %s197, 16
      %s199 = smul.addr %s198, 8
      %s200 = scalar_lea.vmem %s0, %s199
      %p201 = pneg %p38
      %p202 = pneg %p35
      %p203 = pneg %p59
      %p204 = pneg %p56
      %p205 = pneg %p80
      %p206 = pneg %p77
      %p207 = pneg %p101
      %p208 = pneg %p98
      %p209 = pneg %p127
      %p210 = pneg %p124
      %p211 = scmp.lt.s32.totalorder %s17, 3
      %s212 = scalar_select %p211, %s17, 3
      %s213 = smul.addr %s212, 16
      %s214 = smul.addr %s213, 8
      %s215 = scalar_lea.vmem %s4, %s214
      %p216 = pneg %p153
      %p217 = pneg %p150
      %p218 = scmp.lt.s32.totalorder %s17, 3
      %s219 = scalar_select %p218, %s17, 3
      %s220 = smul.addr %s219, 8
      %s221 = smul.addr %s220, 8
      %s222 = scalar_lea.vmem %s5, %s221
      %p223 = scmp.lt.s32.totalorder %s17, 3
      %s224 = scalar_select %p223, %s17, 3
      %s225 = smul.addr %s224, 16
      %s226 = smul.addr %s225, 8
      %s227 = scalar_lea.vmem %s0, %s226
      %p228 = scmp.lt.s32.totalorder %s17, 3
      %s229 = scalar_select %p228, %s17, 3
      %s230 = smul.addr %s229, 16
      %s231 = smul.addr %s230, 8
      %s232 = scalar_lea.vmem %s4, %s231
      %p233 = scmp.lt.s32.totalorder %s17, 3
      %s234 = scalar_select %p233, %s17, 3
      %s235 = smul.addr %s234, 8
      %s236 = smul.addr %s235, 8
      %s237 = scalar_lea.vmem %s5, %s236
      %v238 = vld [vmem:[%s227] sm:$0xff]
      %v239 = vld [vmem:[%s227 + $0x8] sm:$0xff]
      %v240 = vld [vmem:[%s227 + $0x10] sm:$0xff]
      %v241 = vld [vmem:[%s227 + $0x18] sm:$0xff]
      %v242 = vld [vmem:[%s227 + $0x20] sm:$0xff]
      %v243 = vld [vmem:[%s227 + $0x28] sm:$0xff]
      %v244 = vld [vmem:[%s227 + $0x30] sm:$0xff]
      %v245 = vld [vmem:[%s227 + $0x38] sm:$0xff]
      %v246 = vld [vmem:[%s227 + $0x40] sm:$0xff]
      %v247 = vld [vmem:[%s227 + $0x48] sm:$0xff]
      %v248 = vld [vmem:[%s227 + $0x50] sm:$0xff]
      %v249 = vld [vmem:[%s227 + $0x58] sm:$0xff]
      %v250 = vld [vmem:[%s227 + $0x60] sm:$0xff]
      %v251 = vld [vmem:[%s227 + $0x68] sm:$0xff]
      %v252 = vld [vmem:[%s227 + $0x70] sm:$0xff]
      %v253 = vld [vmem:[%s227 + $0x78] sm:$0xff]
      %v254 = vld [vmem:[%s1] sm:$0xff]
      %v255 = vld [vmem:[%s1 + $0x8] sm:$0xff]
      %v256 = vld [vmem:[%s1 + $0x10] sm:$0xff]
      %v257 = vld [vmem:[%s1 + $0x18] sm:$0xff]
      %v258 = vld [vmem:[%s1 + $0x20] sm:$0xff]
      %v259 = vld [vmem:[%s1 + $0x28] sm:$0xff]
      %v260 = vld [vmem:[%s1 + $0x30] sm:$0xff]
      %v261 = vld [vmem:[%s1 + $0x38] sm:$0xff]
      %263 = vset.pattern.permute.xlu0 0
      %264 = vperm.xlu0 %263, %v254
      %v265 = vpop.permute.xlu0 %264
      %268 = vset.pattern.permute.xlu0 0
      %269 = vperm.xlu0 %268, %v255
      %v270 = vpop.permute.xlu0 %269
      %273 = vset.pattern.permute.xlu0 0
      %274 = vperm.xlu0 %273, %v256
      %v275 = vpop.permute.xlu0 %274
      %278 = vset.pattern.permute.xlu0 0
      %279 = vperm.xlu0 %278, %v257
      %v280 = vpop.permute.xlu0 %279
      %283 = vset.pattern.permute.xlu0 0
      %284 = vperm.xlu0 %283, %v258
      %v285 = vpop.permute.xlu0 %284
      %288 = vset.pattern.permute.xlu0 0
      %289 = vperm.xlu0 %288, %v259
      %v290 = vpop.permute.xlu0 %289
      %293 = vset.pattern.permute.xlu0 0
      %294 = vperm.xlu0 %293, %v260
      %v295 = vpop.permute.xlu0 %294
      %298 = vset.pattern.permute.xlu0 0
      %299 = vperm.xlu0 %298, %v261
      %v300 = vpop.permute.xlu0 %299
      %v302 = vmul.f32 %v238, %v265
      %v303 = vmul.f32 %v239, %v265
      %v304 = vmul.f32 %v240, %v270
      %v305 = vmul.f32 %v241, %v270
      %v306 = vmul.f32 %v242, %v275
      %v307 = vmul.f32 %v243, %v275
      %v308 = vmul.f32 %v244, %v280
      %v309 = vmul.f32 %v245, %v280
      %v310 = vmul.f32 %v246, %v285
      %v311 = vmul.f32 %v247, %v285
      %v312 = vmul.f32 %v248, %v290
      %v313 = vmul.f32 %v249, %v290
      %v314 = vmul.f32 %v250, %v295
      %v315 = vmul.f32 %v251, %v295
      %v316 = vmul.f32 %v252, %v300
      %v317 = vmul.f32 %v253, %v300
      %v318 = vld [vmem:[%s2] sm:$0xff]
      %v319 = vld [vmem:[%s2 + $0x8] sm:$0xff]
      %v320 = vld [vmem:[%s2 + $0x10] sm:$0xff]
      %v321 = vld [vmem:[%s2 + $0x18] sm:$0xff]
      %v322 = vld [vmem:[%s2 + $0x20] sm:$0xff]
      %v323 = vld [vmem:[%s2 + $0x28] sm:$0xff]
      %v324 = vld [vmem:[%s2 + $0x30] sm:$0xff]
      %v325 = vld [vmem:[%s2 + $0x38] sm:$0xff]
      %327 = vset.pattern.permute.xlu0 0
      %328 = vperm.xlu0 %327, %v318
      %v329 = vpop.permute.xlu0 %328
      %332 = vset.pattern.permute.xlu0 0
      %333 = vperm.xlu0 %332, %v319
      %v334 = vpop.permute.xlu0 %333
      %337 = vset.pattern.permute.xlu0 0
      %338 = vperm.xlu0 %337, %v320
      %v339 = vpop.permute.xlu0 %338
      %342 = vset.pattern.permute.xlu0 0
      %343 = vperm.xlu0 %342, %v321
      %v344 = vpop.permute.xlu0 %343
      %347 = vset.pattern.permute.xlu0 0
      %348 = vperm.xlu0 %347, %v322
      %v349 = vpop.permute.xlu0 %348
      %352 = vset.pattern.permute.xlu0 0
      %353 = vperm.xlu0 %352, %v323
      %v354 = vpop.permute.xlu0 %353
      %357 = vset.pattern.permute.xlu0 0
      %358 = vperm.xlu0 %357, %v324
      %v359 = vpop.permute.xlu0 %358
      %362 = vset.pattern.permute.xlu0 0
      %363 = vperm.xlu0 %362, %v325
      %v364 = vpop.permute.xlu0 %363
      %v366 = vadd.f32 %v302, %v329
      %v367 = vadd.f32 %v303, %v329
      %v368 = vadd.f32 %v304, %v334
      %v369 = vadd.f32 %v305, %v334
      %v370 = vadd.f32 %v306, %v339
      %v371 = vadd.f32 %v307, %v339
      %v372 = vadd.f32 %v308, %v344
      %v373 = vadd.f32 %v309, %v344
      %v374 = vadd.f32 %v310, %v349
      %v375 = vadd.f32 %v311, %v349
      %v376 = vadd.f32 %v312, %v354
      %v377 = vadd.f32 %v313, %v354
      %v378 = vadd.f32 %v314, %v359
      %v379 = vadd.f32 %v315, %v359
      %v380 = vadd.f32 %v316, %v364
      %v381 = vadd.f32 %v317, %v364
      %v382 = vmax.f32 %v366, 0.0
      %v383 = vmax.f32 %v367, 0.0
      %v384 = vmax.f32 %v368, 0.0
      %v385 = vmax.f32 %v369, 0.0
      %v386 = vmax.f32 %v370, 0.0
      %v387 = vmax.f32 %v371, 0.0
      %v388 = vmax.f32 %v372, 0.0
      %v389 = vmax.f32 %v373, 0.0
      %v390 = vmax.f32 %v374, 0.0
      %v391 = vmax.f32 %v375, 0.0
      %v392 = vmax.f32 %v376, 0.0
      %v393 = vmax.f32 %v377, 0.0
      %v394 = vmax.f32 %v378, 0.0
      %v395 = vmax.f32 %v379, 0.0
      %v396 = vmax.f32 %v380, 0.0
      %v397 = vmax.f32 %v381, 0.0
      %414 = vrot.lane.b32.xlu0 %v382, 1
      %v415 = vpop.permute.xlu0 %414
      %416 = vrot.lane.b32.xlu0 %v383, 1
      %v417 = vpop.permute.xlu0 %416
      %418 = vrot.lane.b32.xlu0 %v384, 1
      %v419 = vpop.permute.xlu0 %418
      %420 = vrot.lane.b32.xlu0 %v385, 1
      %v421 = vpop.permute.xlu0 %420
      %422 = vrot.lane.b32.xlu0 %v386, 1
      %v423 = vpop.permute.xlu0 %422
      %424 = vrot.lane.b32.xlu0 %v387, 1
      %v425 = vpop.permute.xlu0 %424
      %426 = vrot.lane.b32.xlu0 %v388, 1
      %v427 = vpop.permute.xlu0 %426
      %428 = vrot.lane.b32.xlu0 %v389, 1
      %v429 = vpop.permute.xlu0 %428
      %430 = vrot.lane.b32.xlu0 %v390, 1
      %v431 = vpop.permute.xlu0 %430
      %432 = vrot.lane.b32.xlu0 %v391, 1
      %v433 = vpop.permute.xlu0 %432
      %434 = vrot.lane.b32.xlu0 %v392, 1
      %v435 = vpop.permute.xlu0 %434
      %436 = vrot.lane.b32.xlu0 %v393, 1
      %v437 = vpop.permute.xlu0 %436
      %438 = vrot.lane.b32.xlu0 %v394, 1
      %v439 = vpop.permute.xlu0 %438
      %440 = vrot.lane.b32.xlu0 %v395, 1
      %v441 = vpop.permute.xlu0 %440
      %442 = vrot.lane.b32.xlu0 %v396, 1
      %v443 = vpop.permute.xlu0 %442
      %444 = vrot.lane.b32.xlu0 %v397, 1
      %v445 = vpop.permute.xlu0 %444
      %vm446 = vcmask 7168
      %v447 = vsel %vm446, %v415, %v417
      %v448 = vsel %vm446, %v419, %v421
      %v449 = vsel %vm446, %v423, %v425
      %v450 = vsel %vm446, %v427, %v429
      %v451 = vsel %vm446, %v431, %v433
      %v452 = vsel %vm446, %v435, %v437
      %v453 = vsel %vm446, %v439, %v441
      %v454 = vsel %vm446, %v443, %v445
      %v471 = vsel %vm446, 0.0, %v415
      %v472 = vsel %vm446, 0.0, %v419
      %v473 = vsel %vm446, 0.0, %v423
      %v474 = vsel %vm446, 0.0, %v427
      %v475 = vsel %vm446, 0.0, %v431
      %v476 = vsel %vm446, 0.0, %v435
      %v477 = vsel %vm446, 0.0, %v439
      %v478 = vsel %vm446, 0.0, %v443
      %479 = vst [vmem:[#allocation2] sm:$0xff] %v471
      %480 = vst [vmem:[#allocation2 + $0x8] sm:$0xff] %v447
      %481 = vst [vmem:[#allocation2 + $0x10] sm:$0xff] %v472
      %482 = vst [vmem:[#allocation2 + $0x18] sm:$0xff] %v448
      %483 = vst [vmem:[#allocation2 + $0x20] sm:$0xff] %v473
      %484 = vst [vmem:[#allocation2 + $0x28] sm:$0xff] %v449
      %485 = vst [vmem:[#allocation2 + $0x30] sm:$0xff] %v474
      %486 = vst [vmem:[#allocation2 + $0x38] sm:$0xff] %v450
      %487 = vst [vmem:[#allocation2 + $0x40] sm:$0xff] %v475
      %488 = vst [vmem:[#allocation2 + $0x48] sm:$0xff] %v451
      %489 = vst [vmem:[#allocation2 + $0x50] sm:$0xff] %v476
      %490 = vst [vmem:[#allocation2 + $0x58] sm:$0xff] %v452
      %491 = vst [vmem:[#allocation2 + $0x60] sm:$0xff] %v477
      %492 = vst [vmem:[#allocation2 + $0x68] sm:$0xff] %v453
      %493 = vst [vmem:[#allocation2 + $0x70] sm:$0xff] %v478
      %494 = vst [vmem:[#allocation2 + $0x78] sm:$0xff] %v454
      %495 = vst [vmem:[#allocation2 + $0x80] sm:$0xff] %v382
      %496 = vst [vmem:[#allocation2 + $0x88] sm:$0xff] %v383
      %497 = vst [vmem:[#allocation2 + $0x90] sm:$0xff] %v384
      %498 = vst [vmem:[#allocation2 + $0x98] sm:$0xff] %v385
      %499 = vst [vmem:[#allocation2 + $0xa0] sm:$0xff] %v386
      %500 = vst [vmem:[#allocation2 + $0xa8] sm:$0xff] %v387
      %501 = vst [vmem:[#allocation2 + $0xb0] sm:$0xff] %v388
      %502 = vst [vmem:[#allocation2 + $0xb8] sm:$0xff] %v389
      %503 = vst [vmem:[#allocation2 + $0xc0] sm:$0xff] %v390
      %504 = vst [vmem:[#allocation2 + $0xc8] sm:$0xff] %v391
      %505 = vst [vmem:[#allocation2 + $0xd0] sm:$0xff] %v392
      %506 = vst [vmem:[#allocation2 + $0xd8] sm:$0xff] %v393
      %507 = vst [vmem:[#allocation2 + $0xe0] sm:$0xff] %v394
      %508 = vst [vmem:[#allocation2 + $0xe8] sm:$0xff] %v395
      %509 = vst [vmem:[#allocation2 + $0xf0] sm:$0xff] %v396
      %510 = vst [vmem:[#allocation2 + $0xf8] sm:$0xff] %v397
      %511 = vrot.lane.b32.xlu0 %v382, 127
      %v512 = vpop.permute.xlu0 %511
      %513 = vrot.lane.b32.xlu0 %v383, 127
      %v514 = vpop.permute.xlu0 %513
      %515 = vrot.lane.b32.xlu0 %v384, 127
      %v516 = vpop.permute.xlu0 %515
      %517 = vrot.lane.b32.xlu0 %v385, 127
      %v518 = vpop.permute.xlu0 %517
      %519 = vrot.lane.b32.xlu0 %v386, 127
      %v520 = vpop.permute.xlu0 %519
      %521 = vrot.lane.b32.xlu0 %v387, 127
      %v522 = vpop.permute.xlu0 %521
      %523 = vrot.lane.b32.xlu0 %v388, 127
      %v524 = vpop.permute.xlu0 %523
      %525 = vrot.lane.b32.xlu0 %v389, 127
      %v526 = vpop.permute.xlu0 %525
      %527 = vrot.lane.b32.xlu0 %v390, 127
      %v528 = vpop.permute.xlu0 %527
      %529 = vrot.lane.b32.xlu0 %v391, 127
      %v530 = vpop.permute.xlu0 %529
      %531 = vrot.lane.b32.xlu0 %v392, 127
      %v532 = vpop.permute.xlu0 %531
      %533 = vrot.lane.b32.xlu0 %v393, 127
      %v534 = vpop.permute.xlu0 %533
      %535 = vrot.lane.b32.xlu0 %v394, 127
      %v536 = vpop.permute.xlu0 %535
      %537 = vrot.lane.b32.xlu0 %v395, 127
      %v538 = vpop.permute.xlu0 %537
      %539 = vrot.lane.b32.xlu0 %v396, 127
      %v540 = vpop.permute.xlu0 %539
      %541 = vrot.lane.b32.xlu0 %v397, 127
      %v542 = vpop.permute.xlu0 %541
      %vm543 = vcmask 1039360
      %v544 = vsel %vm543, %v512, %v514
      %v545 = vsel %vm543, %v516, %v518
      %v546 = vsel %vm543, %v520, %v522
      %v547 = vsel %vm543, %v524, %v526
      %v548 = vsel %vm543, %v528, %v530
      %v549 = vsel %vm543, %v532, %v534
      %v550 = vsel %vm543, %v536, %v538
      %v551 = vsel %vm543, %v540, %v542
      %v568 = vsel %vm543, %v514, 0.0
      %v569 = vsel %vm543, %v518, 0.0
      %v570 = vsel %vm543, %v522, 0.0
      %v571 = vsel %vm543, %v526, 0.0
      %v572 = vsel %vm543, %v530, 0.0
      %v573 = vsel %vm543, %v534, 0.0
      %v574 = vsel %vm543, %v538, 0.0
      %v575 = vsel %vm543, %v542, 0.0
      %576 = vst [vmem:[#allocation2 + $0x100] sm:$0xff] %v544
      %577 = vst [vmem:[#allocation2 + $0x108] sm:$0xff] %v568
      %578 = vst [vmem:[#allocation2 + $0x110] sm:$0xff] %v545
      %579 = vst [vmem:[#allocation2 + $0x118] sm:$0xff] %v569
      %580 = vst [vmem:[#allocation2 + $0x120] sm:$0xff] %v546
      %581 = vst [vmem:[#allocation2 + $0x128] sm:$0xff] %v570
      %582 = vst [vmem:[#allocation2 + $0x130] sm:$0xff] %v547
      %583 = vst [vmem:[#allocation2 + $0x138] sm:$0xff] %v571
      %584 = vst [vmem:[#allocation2 + $0x140] sm:$0xff] %v548
      %585 = vst [vmem:[#allocation2 + $0x148] sm:$0xff] %v572
      %586 = vst [vmem:[#allocation2 + $0x150] sm:$0xff] %v549
      %587 = vst [vmem:[#allocation2 + $0x158] sm:$0xff] %v573
      %588 = vst [vmem:[#allocation2 + $0x160] sm:$0xff] %v550
      %589 = vst [vmem:[#allocation2 + $0x168] sm:$0xff] %v574
      %590 = vst [vmem:[#allocation2 + $0x170] sm:$0xff] %v551
      %591 = vst [vmem:[#allocation2 + $0x178] sm:$0xff] %v575
      %v592 = vld [vmem:[%s3] sm:$0xff]
      %v593 = vld [vmem:[%s3 + $0x8] sm:$0xff]
      %v594 = vld [vmem:[%s3 + $0x10] sm:$0xff]
      %v595 = vld [vmem:[%s3 + $0x18] sm:$0xff]
      %v596 = vld [vmem:[%s3 + $0x20] sm:$0xff]
      %v597 = vld [vmem:[%s3 + $0x28] sm:$0xff]
      %v598 = vld [vmem:[%s3 + $0x30] sm:$0xff]
      %v599 = vld [vmem:[%s3 + $0x38] sm:$0xff]
      %v600 = vld [vmem:[%s3 + $0x40] sm:$0xff]
      %v601 = vld [vmem:[%s3 + $0x48] sm:$0xff]
      %v602 = vld [vmem:[%s3 + $0x50] sm:$0xff]
      %v603 = vld [vmem:[%s3 + $0x58] sm:$0xff]
      %v604 = vld [vmem:[%s3 + $0x60] sm:$0xff]
      %v605 = vld [vmem:[%s3 + $0x68] sm:$0xff]
      %v606 = vld [vmem:[%s3 + $0x70] sm:$0xff]
      %v607 = vld [vmem:[%s3 + $0x78] sm:$0xff]
      %v608 = vld [vmem:[#allocation2] sm:$0xff]
      %v609 = vld [vmem:[#allocation2 + $0x8] sm:$0xff]
      %v610 = vld [vmem:[#allocation2 + $0x10] sm:$0xff]
      %v611 = vld [vmem:[#allocation2 + $0x18] sm:$0xff]
      %v612 = vld [vmem:[#allocation2 + $0x20] sm:$0xff]
      %v613 = vld [vmem:[#allocation2 + $0x28] sm:$0xff]
      %v614 = vld [vmem:[#allocation2 + $0x30] sm:$0xff]
      %v615 = vld [vmem:[#allocation2 + $0x38] sm:$0xff]
      %v616 = vld [vmem:[#allocation2 + $0x40] sm:$0xff]
      %v617 = vld [vmem:[#allocation2 + $0x48] sm:$0xff]
      %v618 = vld [vmem:[#allocation2 + $0x50] sm:$0xff]
      %v619 = vld [vmem:[#allocation2 + $0x58] sm:$0xff]
      %v620 = vld [vmem:[#allocation2 + $0x60] sm:$0xff]
      %v621 = vld [vmem:[#allocation2 + $0x68] sm:$0xff]
      %v622 = vld [vmem:[#allocation2 + $0x70] sm:$0xff]
      %v623 = vld [vmem:[#allocation2 + $0x78] sm:$0xff]
      %v624 = vld [vmem:[#allocation2 + $0x80] sm:$0xff]
      %v625 = vld [vmem:[#allocation2 + $0x88] sm:$0xff]
      %v626 = vld [vmem:[#allocation2 + $0x90] sm:$0xff]
      %v627 = vld [vmem:[#allocation2 + $0x98] sm:$0xff]
      %v628 = vld [vmem:[#allocation2 + $0xa0] sm:$0xff]
      %v629 = vld [vmem:[#allocation2 + $0xa8] sm:$0xff]
      %v630 = vld [vmem:[#allocation2 + $0xb0] sm:$0xff]
      %v631 = vld [vmem:[#allocation2 + $0xb8] sm:$0xff]
      %v632 = vld [vmem:[#allocation2 + $0xc0] sm:$0xff]
      %v633 = vld [vmem:[#allocation2 + $0xc8] sm:$0xff]
      %v634 = vld [vmem:[#allocation2 + $0xd0] sm:$0xff]
      %v635 = vld [vmem:[#allocation2 + $0xd8] sm:$0xff]
      %v636 = vld [vmem:[#allocation2 + $0xe0] sm:$0xff]
      %v637 = vld [vmem:[#allocation2 + $0xe8] sm:$0xff]
      %v638 = vld [vmem:[#allocation2 + $0xf0] sm:$0xff]
      %v639 = vld [vmem:[#allocation2 + $0xf8] sm:$0xff]
      %v640 = vld [vmem:[#allocation2 + $0x100] sm:$0xff]
      %v641 = vld [vmem:[#allocation2 + $0x108] sm:$0xff]
      %v642 = vld [vmem:[#allocation2 + $0x110] sm:$0xff]
      %v643 = vld [vmem:[#allocation2 + $0x118] sm:$0xff]
      %v644 = vld [vmem:[#allocation2 + $0x120] sm:$0xff]
      %v645 = vld [vmem:[#allocation2 + $0x128] sm:$0xff]
      %v646 = vld [vmem:[#allocation2 + $0x130] sm:$0xff]
      %v647 = vld [vmem:[#allocation2 + $0x138] sm:$0xff]
      %v648 = vld [vmem:[#allocation2 + $0x140] sm:$0xff]
      %v649 = vld [vmem:[#allocation2 + $0x148] sm:$0xff]
      %v650 = vld [vmem:[#allocation2 + $0x150] sm:$0xff]
      %v651 = vld [vmem:[#allocation2 + $0x158] sm:$0xff]
      %v652 = vld [vmem:[#allocation2 + $0x160] sm:$0xff]
      %v653 = vld [vmem:[#allocation2 + $0x168] sm:$0xff]
      %v654 = vld [vmem:[#allocation2 + $0x170] sm:$0xff]
      %v655 = vld [vmem:[#allocation2 + $0x178] sm:$0xff]
      %vm656 = vcmask 523264
      %v658 = vsel %vm656, %v593, 0
      %v661 = vsel %vm656, %v595, 0
      %v664 = vsel %vm656, %v597, 0
      %v667 = vsel %vm656, %v599, 0
      %v670 = vsel %vm656, %v601, 0
      %v673 = vsel %vm656, %v603, 0
      %v676 = vsel %vm656, %v605, 0
      %v679 = vsel %vm656, %v607, 0
      %681 = vmatpush.msra.mxu0 %v638
      %682 = vmatpush.msra.mxu0 %v636
      %683 = vmatpush.msra.mxu0 %v634
      %684 = vmatpush.msra.mxu0 %v632
      %685 = vmatpush.msra.mxu0 %v630
      %686 = vmatpush.msra.mxu0 %v628
      %687 = vmatpush.msra.mxu0 %v626
      %688 = vmatpush.msra.mxu0 %v624
      %689 = vmatpush.msra.mxu0 %v622
      %690 = vmatpush.msra.mxu0 %v620
      %691 = vmatpush.msra.mxu0 %v618
      %692 = vmatpush.msra.mxu0 %v616
      %693 = vmatpush.msra.mxu0 %v614
      %694 = vmatpush.msra.mxu0 %v612
      %695 = vmatpush.msra.mxu0 %v610
      %696 = vmatpush.msra.mxu0 %v608
      %697 = vmatmul.f32.gmra.mxu0 %v592
      %v698 = vpop.f32.mrf.mxu0
      %v699 = vadd.f32 0.0, %v698
      %700 = vmatmul.f32.gmra.mxu0 %v594
      %v701 = vpop.f32.mrf.mxu0
      %v702 = vadd.f32 0.0, %v701
      %703 = vmatmul.f32.gmra.mxu0 %v596
      %v704 = vpop.f32.mrf.mxu0
      %v705 = vadd.f32 0.0, %v704
      %706 = vmatmul.f32.gmra.mxu0 %v598
      %v707 = vpop.f32.mrf.mxu0
      %v708 = vadd.f32 0.0, %v707
      %709 = vmatmul.f32.gmra.mxu0 %v600
      %v710 = vpop.f32.mrf.mxu0
      %v711 = vadd.f32 0.0, %v710
      %712 = vmatmul.f32.gmra.mxu0 %v602
      %v713 = vpop.f32.mrf.mxu0
      %v714 = vadd.f32 0.0, %v713
      %715 = vmatmul.f32.gmra.mxu0 %v604
      %v716 = vpop.f32.mrf.mxu0
      %v717 = vadd.f32 0.0, %v716
      %718 = vmatmul.f32.gmra.mxu0 %v606
      %v719 = vpop.f32.mrf.mxu0
      %v720 = vadd.f32 0.0, %v719
      %721 = vdwg.mxu0
      %722 = vmatpush.msra.mxu0 0.0
      %723 = vmatpush.msra.mxu0 0.0
      %724 = vmatpush.msra.mxu0 0.0
      %725 = vmatpush.msra.mxu0 0.0
      %726 = vmatpush.msra.mxu0 0.0
      %727 = vmatpush.msra.mxu0 0.0
      %728 = vmatpush.msra.mxu0 0.0
      %729 = vmatpush.msra.mxu0 0.0
      %730 = vmatpush.msra.mxu0 %v654
      %731 = vmatpush.msra.mxu0 %v652
      %732 = vmatpush.msra.mxu0 %v650
      %733 = vmatpush.msra.mxu0 %v648
      %734 = vmatpush.msra.mxu0 %v646
      %735 = vmatpush.msra.mxu0 %v644
      %736 = vmatpush.msra.mxu0 %v642
      %737 = vmatpush.msra.mxu0 %v640
      %738 = vmatmul.f32.gmra.mxu0 %v658
      %v739 = vpop.f32.mrf.mxu0
      %v740 = vadd.f32 %v699, %v739
      %741 = vmatmul.f32.gmra.mxu0 %v661
      %v742 = vpop.f32.mrf.mxu0
      %v743 = vadd.f32 %v702, %v742
      %744 = vmatmul.f32.gmra.mxu0 %v664
      %v745 = vpop.f32.mrf.mxu0
      %v746 = vadd.f32 %v705, %v745
      %747 = vmatmul.f32.gmra.mxu0 %v667
      %v748 = vpop.f32.mrf.mxu0
      %v749 = vadd.f32 %v708, %v748
      %750 = vmatmul.f32.gmra.mxu0 %v670
      %v751 = vpop.f32.mrf.mxu0
      %v752 = vadd.f32 %v711, %v751
      %753 = vmatmul.f32.gmra.mxu0 %v673
      %v754 = vpop.f32.mrf.mxu0
      %v755 = vadd.f32 %v714, %v754
      %756 = vmatmul.f32.gmra.mxu0 %v676
      %v757 = vpop.f32.mrf.mxu0
      %v758 = vadd.f32 %v717, %v757
      %759 = vmatmul.f32.gmra.mxu0 %v679
      %v760 = vpop.f32.mrf.mxu0
      %v761 = vadd.f32 %v720, %v760
      %762 = vdwg.mxu0
      %763 = vmatpush.msra.mxu0 %v639
      %764 = vmatpush.msra.mxu0 %v637
      %765 = vmatpush.msra.mxu0 %v635
      %766 = vmatpush.msra.mxu0 %v633
      %767 = vmatpush.msra.mxu0 %v631
      %768 = vmatpush.msra.mxu0 %v629
      %769 = vmatpush.msra.mxu0 %v627
      %770 = vmatpush.msra.mxu0 %v625
      %771 = vmatpush.msra.mxu0 %v623
      %772 = vmatpush.msra.mxu0 %v621
      %773 = vmatpush.msra.mxu0 %v619
      %774 = vmatpush.msra.mxu0 %v617
      %775 = vmatpush.msra.mxu0 %v615
      %776 = vmatpush.msra.mxu0 %v613
      %777 = vmatpush.msra.mxu0 %v611
      %778 = vmatpush.msra.mxu0 %v609
      %779 = vmatmul.f32.gmra.mxu0 %v592
      %v780 = vpop.f32.mrf.mxu0
      %v781 = vadd.f32 0.0, %v780
      %782 = vmatmul.f32.gmra.mxu0 %v594
      %v783 = vpop.f32.mrf.mxu0
      %v784 = vadd.f32 0.0, %v783
      %785 = vmatmul.f32.gmra.mxu0 %v596
      %v786 = vpop.f32.mrf.mxu0
      %v787 = vadd.f32 0.0, %v786
      %788 = vmatmul.f32.gmra.mxu0 %v598
      %v789 = vpop.f32.mrf.mxu0
      %v790 = vadd.f32 0.0, %v789
      %791 = vmatmul.f32.gmra.mxu0 %v600
      %v792 = vpop.f32.mrf.mxu0
      %v793 = vadd.f32 0.0, %v792
      %794 = vmatmul.f32.gmra.mxu0 %v602
      %v795 = vpop.f32.mrf.mxu0
      %v796 = vadd.f32 0.0, %v795
      %797 = vmatmul.f32.gmra.mxu0 %v604
      %v798 = vpop.f32.mrf.mxu0
      %v799 = vadd.f32 0.0, %v798
      %800 = vmatmul.f32.gmra.mxu0 %v606
      %v801 = vpop.f32.mrf.mxu0
      %v802 = vadd.f32 0.0, %v801
      %803 = vdwg.mxu0
      %804 = vmatpush.msra.mxu0 0.0
      %805 = vmatpush.msra.mxu0 0.0
      %806 = vmatpush.msra.mxu0 0.0
      %807 = vmatpush.msra.mxu0 0.0
      %808 = vmatpush.msra.mxu0 0.0
      %809 = vmatpush.msra.mxu0 0.0
      %810 = vmatpush.msra.mxu0 0.0
      %811 = vmatpush.msra.mxu0 0.0
      %812 = vmatpush.msra.mxu0 %v655
      %813 = vmatpush.msra.mxu0 %v653
      %814 = vmatpush.msra.mxu0 %v651
      %815 = vmatpush.msra.mxu0 %v649
      %816 = vmatpush.msra.mxu0 %v647
      %817 = vmatpush.msra.mxu0 %v645
      %818 = vmatpush.msra.mxu0 %v643
      %819 = vmatpush.msra.mxu0 %v641
      %820 = vmatmul.f32.gmra.mxu0 %v658
      %v821 = vpop.f32.mrf.mxu0
      %v822 = vadd.f32 %v781, %v821
      %823 = vmatmul.f32.gmra.mxu0 %v661
      %v824 = vpop.f32.mrf.mxu0
      %v825 = vadd.f32 %v784, %v824
      %826 = vmatmul.f32.gmra.mxu0 %v664
      %v827 = vpop.f32.mrf.mxu0
      %v828 = vadd.f32 %v787, %v827
      %829 = vmatmul.f32.gmra.mxu0 %v667
      %v830 = vpop.f32.mrf.mxu0
      %v831 = vadd.f32 %v790, %v830
      %832 = vmatmul.f32.gmra.mxu0 %v670
      %v833 = vpop.f32.mrf.mxu0
      %v834 = vadd.f32 %v793, %v833
      %835 = vmatmul.f32.gmra.mxu0 %v673
      %v836 = vpop.f32.mrf.mxu0
      %v837 = vadd.f32 %v796, %v836
      %838 = vmatmul.f32.gmra.mxu0 %v676
      %v839 = vpop.f32.mrf.mxu0
      %v840 = vadd.f32 %v799, %v839
      %841 = vmatmul.f32.gmra.mxu0 %v679
      %v842 = vpop.f32.mrf.mxu0
      %v843 = vadd.f32 %v802, %v842
      %844 = vdwg.mxu0
      %845 = vst [vmem:[%s232] sm:$0xff] %v740
      %846 = vst [vmem:[%s232 + $0x8] sm:$0xff] %v822
      %847 = vst [vmem:[%s232 + $0x10] sm:$0xff] %v743
      %848 = vst [vmem:[%s232 + $0x18] sm:$0xff] %v825
      %849 = vst [vmem:[%s232 + $0x20] sm:$0xff] %v746
      %850 = vst [vmem:[%s232 + $0x28] sm:$0xff] %v828
      %851 = vst [vmem:[%s232 + $0x30] sm:$0xff] %v749
      %852 = vst [vmem:[%s232 + $0x38] sm:$0xff] %v831
      %853 = vst [vmem:[%s232 + $0x40] sm:$0xff] %v752
      %854 = vst [vmem:[%s232 + $0x48] sm:$0xff] %v834
      %855 = vst [vmem:[%s232 + $0x50] sm:$0xff] %v755
      %856 = vst [vmem:[%s232 + $0x58] sm:$0xff] %v837
      %857 = vst [vmem:[%s232 + $0x60] sm:$0xff] %v758
      %858 = vst [vmem:[%s232 + $0x68] sm:$0xff] %v840
      %859 = vst [vmem:[%s232 + $0x70] sm:$0xff] %v761
      %860 = vst [vmem:[%s232 + $0x78] sm:$0xff] %v843
      %v861 = vadd.f32 %v740, %v822
      %862 = vadd.xlane.f32.xlu0 %v861
      %v863 = vpop.xlane.xlu0 %862
      %v864 = vadd.f32 %v743, %v825
      %865 = vadd.xlane.f32.xlu0 %v864
      %v866 = vpop.xlane.xlu0 %865
      %v867 = vadd.f32 %v746, %v828
      %868 = vadd.xlane.f32.xlu0 %v867
      %v869 = vpop.xlane.xlu0 %868
      %v870 = vadd.f32 %v749, %v831
      %871 = vadd.xlane.f32.xlu0 %v870
      %v872 = vpop.xlane.xlu0 %871
      %v873 = vadd.f32 %v752, %v834
      %874 = vadd.xlane.f32.xlu0 %v873
      %v875 = vpop.xlane.xlu0 %874
      %v876 = vadd.f32 %v755, %v837
      %877 = vadd.xlane.f32.xlu0 %v876
      %v878 = vpop.xlane.xlu0 %877
      %v879 = vadd.f32 %v758, %v840
      %880 = vadd.xlane.f32.xlu0 %v879
      %v881 = vpop.xlane.xlu0 %880
      %v882 = vadd.f32 %v761, %v843
      %883 = vadd.xlane.f32.xlu0 %v882
      %v884 = vpop.xlane.xlu0 %883
      %v885 = vmul.f32 %v740, %v740
      %v886 = vmul.f32 %v822, %v822
      %v887 = vmul.f32 %v743, %v743
      %v888 = vmul.f32 %v825, %v825
      %v889 = vmul.f32 %v746, %v746
      %v890 = vmul.f32 %v828, %v828
      %v891 = vmul.f32 %v749, %v749
      %v892 = vmul.f32 %v831, %v831
      %v893 = vmul.f32 %v752, %v752
      %v894 = vmul.f32 %v834, %v834
      %v895 = vmul.f32 %v755, %v755
      %v896 = vmul.f32 %v837, %v837
      %v897 = vmul.f32 %v758, %v758
      %v898 = vmul.f32 %v840, %v840
      %v899 = vmul.f32 %v761, %v761
      %v900 = vmul.f32 %v843, %v843
      %v901 = vadd.f32 %v885, %v886
      %902 = vadd.xlane.f32.xlu0 %v901
      %v903 = vpop.xlane.xlu0 %902
      %v904 = vadd.f32 %v887, %v888
      %905 = vadd.xlane.f32.xlu0 %v904
      %v906 = vpop.xlane.xlu0 %905
      %v907 = vadd.f32 %v889, %v890
      %908 = vadd.xlane.f32.xlu0 %v907
      %v909 = vpop.xlane.xlu0 %908
      %v910 = vadd.f32 %v891, %v892
      %911 = vadd.xlane.f32.xlu0 %v910
      %v912 = vpop.xlane.xlu0 %911
      %v913 = vadd.f32 %v893, %v894
      %914 = vadd.xlane.f32.xlu0 %v913
      %v915 = vpop.xlane.xlu0 %914
      %v916 = vadd.f32 %v895, %v896
      %917 = vadd.xlane.f32.xlu0 %v916
      %v918 = vpop.xlane.xlu0 %917
      %v919 = vadd.f32 %v897, %v898
      %920 = vadd.xlane.f32.xlu0 %v919
      %v921 = vpop.xlane.xlu0 %920
      %v922 = vadd.f32 %v899, %v900
      %923 = vadd.xlane.f32.xlu0 %v922
      %v924 = vpop.xlane.xlu0 %923
      %v925 = vsel %vm446, %v863, %v903
      %v926 = vsel %vm446, %v866, %v906
      %v927 = vsel %vm446, %v869, %v909
      %v928 = vsel %vm446, %v872, %v912
      %v929 = vsel %vm446, %v875, %v915
      %v930 = vsel %vm446, %v878, %v918
      %v931 = vsel %vm446, %v881, %v921
      %v932 = vsel %vm446, %v884, %v924
      %vm933 = vcmask 15360
      %934 = vst.msk [vmem:[%s237] sm:$0xff] %vm933, %v925
      %935 = vst.msk [vmem:[%s237 + $0x8] sm:$0xff] %vm933, %v926
      %936 = vst.msk [vmem:[%s237 + $0x10] sm:$0xff] %vm933, %v927
      %937 = vst.msk [vmem:[%s237 + $0x18] sm:$0xff] %vm933, %v928
      %938 = vst.msk [vmem:[%s237 + $0x20] sm:$0xff] %vm933, %v929
      %939 = vst.msk [vmem:[%s237 + $0x28] sm:$0xff] %vm933, %v930
      %940 = vst.msk [vmem:[%s237 + $0x30] sm:$0xff] %vm933, %v931
      %941 = vst.msk [vmem:[%s237 + $0x38] sm:$0xff] %vm933, %v932
      %p942 = scmp.lt.s32.totalorder %s17, 3
      %s943 = scalar_select %p942, %s17, 3
      %s944 = smul.addr %s943, 16
      %s945 = smul.addr %s944, 8
      %s946 = scalar_lea.vmem %s4, %s945
      %p947 = scmp.lt.s32.totalorder %s17, 3
      %s948 = scalar_select %p947, %s17, 3
      %s949 = smul.addr %s948, 8
      %s950 = smul.addr %s949, 8
      %s951 = scalar_lea.vmem %s5, %s950
      // Predicated region
      $region37: #{residual_block.4} parent=35 // pred_check
        %p952 = pneg %p124
      $region38: #{residual_block.4} parent=35 // pred_check_branch
        %954 = sbr.rel (%p952) target = $region40
      $region39: #{residual_block.4} parent=35 // pred_region
        _
      $region40: #{residual_block.4} parent=35 // pred_fallthru
        _
      // Predicated region
      $region41: #{residual_block.4} parent=35 // pred_check
        %p955 = pneg %p150
      $region42: #{residual_block.4} parent=35 // pred_check_branch
        %957 = sbr.rel (%p955) target = $region44
      $region43: #{residual_block.4} parent=35 // pred_region
        _
      $region44: #{residual_block.4} parent=35 // pred_fallthru
        _
    $region36: #{residual_block.4} parent=5 // pred_fallthru
      _
    %p958 = scmp.le.s32.totalorder 2, %s12
    // Predicated region
    $region45: #{residual_block.4} parent=5 // pred_check
      %p959 = pneg %p958
    $region46: #{residual_block.4} parent=5 // pred_check_branch
      %961 = sbr.rel (%p959) target = $region48
    $region47: #{residual_block.4} parent=5 // pred_region
      %s962 = ssub.s32 %s12, 2
      // Predicated region
      $region49: #{residual_block.4} parent=47 // pred_check
        %p963 = pneg %p130
      $region50: #{residual_block.4} parent=47 // pred_check_branch
        %965 = sbr.rel (%p963) target = $region52
      $region51: #{residual_block.4} parent=47 // pred_region
        %p966 = scmp.lt.s32.totalorder %s18, 3
        %s967 = scalar_select %p966, %s18, 3
        %s968 = smul.addr %s967, 16
        %s969 = smul.addr %s968, 8
        %s970 = scalar_lea.vmem %s4, %s969
      $region52: #{residual_block.4} parent=47 // pred_fallthru
        _
      // Predicated region
      $region53: #{residual_block.4} parent=47 // pred_check
        %p971 = pneg %p156
      $region54: #{residual_block.4} parent=47 // pred_check_branch
        %973 = sbr.rel (%p971) target = $region56
      $region55: #{residual_block.4} parent=47 // pred_region
        %p974 = scmp.lt.s32.totalorder %s18, 3
        %s975 = scalar_select %p974, %s18, 3
        %s976 = smul.addr %s975, 8
        %s977 = smul.addr %s976, 8
        %s978 = scalar_lea.vmem %s5, %s977
      $region56: #{residual_block.4} parent=47 // pred_fallthru
        _
    $region48: #{residual_block.4} parent=5 // pred_fallthru
      _
  $region6: #{residual_block.4} parent=0 // loop_footer
    %s16 = sadd.s32 1, %s12
  $region7: #{residual_block.4} parent=0 // loop_footer_branch
    %11 = sbr.rel target = $region3
  $region8: #{residual_block.4} parent=0 // loop_exit
    _

</llo_original>
